<compile_context>
chip_gen: v7x
topology: tpu7x:2x2x1
jax: 0.10.0
libtpu: 0.0.40
codegen_flags: <defaults>
</compile_context>

<pallas_src>
import functools

import jax
import jax.numpy as jnp
from jax.experimental import pallas as pl
from jax.experimental.pallas import tpu as pltpu


# ----------------------------------------------------------------------------
# Fused kernel: flow (all coupling layers) + prior head + reparam + decode,
# single lane-dense packed output slab.
# ----------------------------------------------------------------------------
def fused_kernel(x_ref, eps_ref,
                 w1_ref, b1_ref, wh_ref, bh_ref,
                 wst_ref, bst_ref, resc_ref,
                 wprior_ref, bprior_ref,
                 wd_ref, bd_ref,
                 out_ref,
                 *, num_coupling, num_hidden, in_feat, pad_width):
    z = x_ref[...]                                        # [TB, D]
    logdet = jnp.zeros((z.shape[0], 1), jnp.float32)      # in-register accumulator

    # ---- affine coupling layers (statically unrolled) ----
    for l in range(num_coupling):
        # conditioning mask is folded into w1's rows -> plain matmul
        h = jnp.dot(z, w1_ref[l], preferred_element_type=jnp.float32) + b1_ref[l]
        h = jnp.maximum(h, 0.0)
        for k in range(num_hidden):
            h = jnp.dot(h, wh_ref[l, k],
                        preferred_element_type=jnp.float32) + bh_ref[l, k]
            h = jnp.maximum(h, 0.0)
        # fused s|t head: one [H, 2D] matmul, in-vreg split
        st = jnp.dot(h, wst_ref[l], preferred_element_type=jnp.float32) + bst_ref[l]
        s = resc_ref[l] * jnp.tanh(st[:, :in_feat])       # resc = rescale * inv_mask
        t = st[:, in_feat:]                               # inv_mask folded into wt/bt
        z = z * jnp.exp(s) + t
        logdet = logdet + jnp.sum(s, axis=-1, keepdims=True)

    # ---- Gaussian prior head (fused mean|log_sd weights) ----
    prior = jnp.dot(z, wprior_ref[...],
                    preferred_element_type=jnp.float32) + bprior_ref[...]
    mean = prior[:, :in_feat]
    log_sd = prior[:, in_feat:]

    # ---- reparameterize (matches reference: std = exp(0.5 * arg)) ----
    std = jnp.exp(0.5 * log_sd)
    z_repar = eps_ref[...] * std + mean

    # ---- decode + softmax (EXACT normalization) ----
    logits = jnp.dot(z_repar, wd_ref[...],
                     preferred_element_type=jnp.float32) + bd_ref[...]
    lmax = jnp.max(logits, axis=-1, keepdims=True)
    e = jnp.exp(logits - lmax)
    probs = e / jnp.sum(e, axis=-1, keepdims=True)

    # ---- single lane-dense store of the packed output slab ----
    pieces = [z, mean, log_sd, logdet, probs]
    if pad_width > 0:
        pieces.append(jnp.zeros((z.shape[0], pad_width), jnp.float32))
    out_ref[...] = jnp.concatenate(pieces, axis=-1)


# ----------------------------------------------------------------------------
# Wrapper
# ----------------------------------------------------------------------------
_WEIGHT_KEYS = ("w1", "b1", "wh", "bh", "wst", "bst", "resc",
                "wprior", "bprior", "wd", "bd")


def latent_model_forward(params, x, eps, tile_b=1024):
    """Mirrors LatentModel.forward: returns
       (z, mean, log_sd, logdet, [sigma1, sigma2], softmax(logits))."""
    B, D = x.shape
    C = params["wd"].shape[-1]
    L = params["w1"].shape[0]
    NH = params["wh"].shape[1]

    # Packed slab: [z | mean | log_sd | logdet | probs | zero-pad] -> mult of 128
    useful = 3 * D + 1 + C
    pad_total = max(128, ((useful + 127) // 128) * 128)
    pad_width = pad_total - useful

    # Batch tile: as large as possible, but keep >= 2 grid steps when the
    # batch allows it (v7x has 2 TensorCores; a single-step grid idles one).
    tb = min(B, tile_b)
    if B // tb < 2 and B >= 16 and (B // 2) % 8 == 0:
        tb = B // 2
    assert B % tb == 0, "batch must be divisible by the batch tile"
    # TODO(synk): support ragged B via padding + pl.cdiv if ever needed.
    grid = (B // tb,)

    def io_spec(last):
        return pl.BlockSpec((tb, last), lambda i: (i, 0))

    def resident(arr):
        nd = arr.ndim
        return pl.BlockSpec(arr.shape, lambda i, _n=nd: (0,) * _n)

    weights = [params[k] for k in _WEIGHT_KEYS]

    # Explicit scoped-VMEM budget (v5e default is only 16 MiB): resident
    # weights (double-buffered by the pipeline) + double-buffered I/O blocks.
    weight_bytes = sum(int(w.size) * w.dtype.itemsize for w in weights)
    io_bytes = 2 * (2 * tb * D * 4) + 2 * (tb * pad_total * 4)
    vmem_limit = 2 * weight_bytes + io_bytes + (2 << 20)
    vmem_limit = int(min(max(vmem_limit, 8 << 20), 48 << 20))

    slab = pl.pallas_call(
        functools.partial(fused_kernel, num_coupling=L, num_hidden=NH,
                          in_feat=D, pad_width=pad_width),
        grid=grid,
        in_specs=[io_spec(D), io_spec(D)] + [resident(w) for w in weights],
        out_specs=pl.BlockSpec((tb, pad_total), lambda i: (i, 0)),
        out_shape=jax.ShapeDtypeStruct((B, pad_total), jnp.float32),
        compiler_params=pltpu.CompilerParams(
            dimension_semantics=("parallel",),      # shard batch tiles across TCs
            vmem_limit_bytes=vmem_limit),
    )(x, eps, *weights)

    z = slab[:, 0:D]
    mean = slab[:, D:2 * D]
    log_sd = slab[:, 2 * D:3 * D]
    logdet = slab[:, 3 * D]
    probs = slab[:, 3 * D + 1:3 * D + 1 + C]

    return (z, mean, log_sd, logdet,
            [params["sigma1"], params["sigma2"]], probs)


# ----------------------------------------------------------------------------
# Deterministic parameters (PyTorch Linear-style uniform init), with the
# binary coupling masks folded into the weights and the s|t / mean|log_sd
# heads pre-fused at construction time.
# ----------------------------------------------------------------------------
def _linear_init(key, fan_in, shape):
    bound = 1.0 / jnp.sqrt(float(fan_in))
    return jax.random.uniform(key, shape, jnp.float32, -bound, bound)


def make_params(key, in_feat, hidden_dim, num_hidden, num_coupling, n_class,
                init_zeros=True):
    assert num_hidden >= 1
    half = in_feat // 2
    idx = jnp.arange(in_feat)

    w1s, b1s, whs, bhs = [], [], [], []
    wsts, bsts, rescs = [], [], []
    for i in range(num_coupling):
        key, k1, kb1, ks, kbs, kt, kbt, kh = jax.random.split(key, 8)
        mask = ((idx < half) if (i % 2 == 0) else (idx >= half)).astype(jnp.float32)
        inv_m = 1.0 - mask

        # fold conditioning mask into the first Linear's rows
        w1s.append(_linear_init(k1, in_feat, (in_feat, hidden_dim)) * mask[:, None])
        b1s.append(_linear_init(kb1, in_feat, (1, hidden_dim)))

        kh_keys = jax.random.split(kh, 2 * num_hidden)
        whs.append(jnp.stack([_linear_init(kh_keys[2 * l], hidden_dim,
                                           (hidden_dim, hidden_dim))
                              for l in range(num_hidden)]))
        bhs.append(jnp.stack([_linear_init(kh_keys[2 * l + 1], hidden_dim,
                                           (1, hidden_dim))
                              for l in range(num_hidden)]))

        if init_zeros:
            ws = jnp.zeros((hidden_dim, in_feat), jnp.float32)
            bs = jnp.zeros((1, in_feat), jnp.float32)
            wt = jnp.zeros((hidden_dim, in_feat), jnp.float32)
            bt = jnp.zeros((1, in_feat), jnp.float32)
        else:
            ws = _linear_init(ks, hidden_dim, (hidden_dim, in_feat))
            bs = _linear_init(kbs, hidden_dim, (1, in_feat))
            wt = _linear_init(kt, hidden_dim, (hidden_dim, in_feat))
            bt = _linear_init(kbt, hidden_dim, (1, in_feat))
        # fused s|t head, inv_mask folded into the t half
        wsts.append(jnp.concatenate([ws, wt * inv_m[None, :]], axis=1))
        bsts.append(jnp.concatenate([bs, bt * inv_m[None, :]], axis=1))
        rescs.append(jnp.ones((1, in_feat), jnp.float32) * inv_m[None, :])

    params = {
        "w1": jnp.stack(w1s), "b1": jnp.stack(b1s),
        "wh": jnp.stack(whs), "bh": jnp.stack(bhs),
        "wst": jnp.stack(wsts), "bst": jnp.stack(bsts),
        "resc": jnp.stack(rescs),
    }

    # Gaussian prior head, fused mean|log_sd
    key, kpm, kbpm, kps, kbps, kd, kbd = jax.random.split(key, 7)
    if init_zeros:
        wmean = jnp.zeros((in_feat, in_feat), jnp.float32)
        bmean = jnp.zeros((1, in_feat), jnp.float32)
        wlsd = jnp.zeros((in_feat, in_feat), jnp.float32)
        blsd = jnp.zeros((1, in_feat), jnp.float32)
    else:
        wmean = _linear_init(kpm, in_feat, (in_feat, in_feat))
        bmean = _linear_init(kbpm, in_feat, (1, in_feat))
        wlsd = _linear_init(kps, in_feat, (in_feat, in_feat))
        blsd = _linear_init(kbps, in_feat, (1, in_feat))
    params["wprior"] = jnp.concatenate([wmean, wlsd], axis=1)
    params["bprior"] = jnp.concatenate([bmean, blsd], axis=1)

    # decode = nn.Linear(in_feat, n_class)
    params["wd"] = _linear_init(kd, in_feat, (in_feat, n_class))
    params["bd"] = _linear_init(kbd, in_feat, (1, n_class))

    # sigma1 / sigma2 = nn.Parameter(torch.zeros(1))
    params["sigma1"] = jnp.zeros((1,), jnp.float32)
    params["sigma2"] = jnp.zeros((1,), jnp.float32)
    return params


# ----------------------------------------------------------------------------
# Pure-JAX reference (for correctness check)
# ----------------------------------------------------------------------------
def reference_forward(params, x, eps):
    L = params["w1"].shape[0]
    NH = params["wh"].shape[1]
    D = x.shape[1]
    z = x
    logdet = jnp.zeros((x.shape[0],), jnp.float32)
    for l in range(L):
        h = jnp.maximum(z @ params["w1"][l] + params["b1"][l], 0.0)
        for k in range(NH):
            h = jnp.maximum(h @ params["wh"][l, k] + params["bh"][l, k], 0.0)
        st = h @ params["wst"][l] + params["bst"][l]
        s = params["resc"][l] * jnp.tanh(st[:, :D])
        t = st[:, D:]
        z = z * jnp.exp(s) + t
        logdet = logdet + jnp.sum(s, axis=-1)
    prior = z @ params["wprior"] + params["bprior"]
    mean, log_sd = prior[:, :D], prior[:, D:]
    z_repar = eps * jnp.exp(0.5 * log_sd) + mean
    logits = z_repar @ params["wd"] + params["bd"]
    return z, mean, log_sd, logdet, jax.nn.softmax(logits, axis=-1)


# ----------------------------------------------------------------------------
if __name__ == "__main__":
    # cfg: FLOW.IN_FEAT=16, FLOW.MLP_DIM=32, FLOW.N_FLOW=2 (MLP depth),
    #      FLOW.N_BLOCK=2 (coupling layers), FLOW.INIT_ZEROS=False,
    #      DATASET.N_CLASS=4, batch B=8.
    B, IN_FEAT, MLP_DIM, N_FLOW, N_BLOCK, N_CLASS = 8, 16, 32, 2, 2, 4

    key = jax.random.PRNGKey(0)
    kparam, kx, keps = jax.random.split(key, 3)

    params = make_params(kparam, IN_FEAT, MLP_DIM, N_FLOW, N_BLOCK, N_CLASS,
                         init_zeros=False)
    x = jax.random.normal(kx, (B, IN_FEAT), jnp.float32)
    eps = jax.random.normal(keps, (B, IN_FEAT), jnp.float32)  # torch.randn_like

    z, mean, log_sd, logdet, sigmas, probs = latent_model_forward(params, x, eps)
    jax.block_until_ready((z, mean, log_sd, logdet, sigmas, probs))

    # shapes
    assert z.shape == (B, IN_FEAT)
    assert mean.shape == (B, IN_FEAT) and log_sd.shape == (B, IN_FEAT)
    assert logdet.shape == (B,)
    assert probs.shape == (B, N_CLASS)

    # numerics vs pure-JAX reference
    z_r, mean_r, lsd_r, logdet_r, probs_r = reference_forward(params, x, eps)
    assert jnp.allclose(z, z_r, atol=1e-3, rtol=1e-3)
    assert jnp.allclose(mean, mean_r, atol=1e-3, rtol=1e-3)
    assert jnp.allclose(log_sd, lsd_r, atol=1e-3, rtol=1e-3)
    assert jnp.allclose(logdet, logdet_r, atol=1e-3, rtol=1e-3)
    assert jnp.allclose(probs, probs_r, atol=1e-3, rtol=1e-3)
    assert jnp.allclose(jnp.sum(probs, axis=-1), 1.0, atol=1e-4)

    print("KERNEL_OK")
</pallas_src>

<mosaic_0001>
module attributes {stable_mosaic.version = 11 : i64} {
  func.func @fused_kernel(%arg0: i32, %arg1: memref<8x16xf32, #tpu.memory_space<vmem>>, %arg2: memref<8x16xf32, #tpu.memory_space<vmem>>, %arg3: memref<2x16x32xf32, #tpu.memory_space<vmem>>, %arg4: memref<2x1x32xf32, #tpu.memory_space<vmem>>, %arg5: memref<2x2x32x32xf32, #tpu.memory_space<vmem>>, %arg6: memref<2x2x1x32xf32, #tpu.memory_space<vmem>>, %arg7: memref<2x32x32xf32, #tpu.memory_space<vmem>>, %arg8: memref<2x1x32xf32, #tpu.memory_space<vmem>>, %arg9: memref<2x1x16xf32, #tpu.memory_space<vmem>>, %arg10: memref<16x32xf32, #tpu.memory_space<vmem>>, %arg11: memref<1x32xf32, #tpu.memory_space<vmem>>, %arg12: memref<16x4xf32, #tpu.memory_space<vmem>>, %arg13: memref<1x4xf32, #tpu.memory_space<vmem>>, %arg14: memref<8x128xf32, #tpu.memory_space<vmem>>) attributes {dimension_semantics = [#tpu.dimension_semantics<parallel>], iteration_bounds = array<i64: 1>, scalar_prefetch = 0 : i64, scratch_operands = 0 : i64, tpu.core_type = #tpu.core_type<tc>, window_params = [{transform_indices = @transform_0, window_bounds = array<i64: 8, 16>}, {transform_indices = @transform_1, window_bounds = array<i64: 8, 16>}, {pipeline_mode = #tpu.pipeline_mode<synchronous>, transform_indices = @transform_2, window_bounds = array<i64: 2, 16, 32>}, {pipeline_mode = #tpu.pipeline_mode<synchronous>, transform_indices = @transform_3, window_bounds = array<i64: 2, 1, 32>}, {pipeline_mode = #tpu.pipeline_mode<synchronous>, transform_indices = @transform_4, window_bounds = array<i64: 2, 2, 32, 32>}, {pipeline_mode = #tpu.pipeline_mode<synchronous>, transform_indices = @transform_5, window_bounds = array<i64: 2, 2, 1, 32>}, {pipeline_mode = #tpu.pipeline_mode<synchronous>, transform_indices = @transform_6, window_bounds = array<i64: 2, 32, 32>}, {pipeline_mode = #tpu.pipeline_mode<synchronous>, transform_indices = @transform_7, window_bounds = array<i64: 2, 1, 32>}, {pipeline_mode = #tpu.pipeline_mode<synchronous>, transform_indices = @transform_8, window_bounds = array<i64: 2, 1, 16>}, {pipeline_mode = #tpu.pipeline_mode<synchronous>, transform_indices = @transform_9, window_bounds = array<i64: 16, 32>}, {pipeline_mode = #tpu.pipeline_mode<synchronous>, transform_indices = @transform_10, window_bounds = array<i64: 1, 32>}, {pipeline_mode = #tpu.pipeline_mode<synchronous>, transform_indices = @transform_11, window_bounds = array<i64: 16, 4>}, {pipeline_mode = #tpu.pipeline_mode<synchronous>, transform_indices = @transform_12, window_bounds = array<i64: 1, 4>}, {transform_indices = @transform_13, window_bounds = array<i64: 8, 128>}]} {
    %c0 = arith.constant 0 : index
    %c0_0 = arith.constant 0 : index
    %0 = vector.load %arg1[%c0, %c0_0] : memref<8x16xf32, #tpu.memory_space<vmem>>, vector<8x16xf32>
    %cst = arith.constant 0.000000e+00 : f32
    %1 = vector.broadcast %cst : f32 to vector<8x1xf32>
    %c0_1 = arith.constant 0 : index
    %c0_2 = arith.constant 0 : index
    %c0_3 = arith.constant 0 : index
    %2 = vector.load %arg3[%c0_1, %c0_2, %c0_3] : memref<2x16x32xf32, #tpu.memory_space<vmem>>, vector<1x16x32xf32>
    %3 = vector.shape_cast %2 : vector<1x16x32xf32> to vector<16x32xf32>
    %cst_4 = arith.constant dense<0.000000e+00> : vector<8x32xf32>
    %4 = tpu.matmul %0, %3, %cst_4 {dimension_numbers = #tpu.dot_dimension_numbers<[1], [0], [0], [1], [0, 0, 1, 1], [], []>} : vector<8x16xf32>, vector<16x32xf32>, vector<8x32xf32> -> vector<8x32xf32>
    %c0_5 = arith.constant 0 : index
    %c0_6 = arith.constant 0 : index
    %c0_7 = arith.constant 0 : index
    %5 = vector.load %arg4[%c0_5, %c0_6, %c0_7] : memref<2x1x32xf32, #tpu.memory_space<vmem>>, vector<1x1x32xf32>
    %6 = vector.shape_cast %5 : vector<1x1x32xf32> to vector<1x32xf32>
    %7 = vector.broadcast %6 : vector<1x32xf32> to vector<8x32xf32>
    %8 = arith.addf %4, %7 : vector<8x32xf32>
    %cst_8 = arith.constant 0.000000e+00 : f32
    %9 = vector.broadcast %cst_8 : f32 to vector<8x32xf32>
    %10 = arith.maximumf %8, %9 : vector<8x32xf32>
    %c0_9 = arith.constant 0 : index
    %c0_10 = arith.constant 0 : index
    %c0_11 = arith.constant 0 : index
    %c0_12 = arith.constant 0 : index
    %11 = vector.load %arg5[%c0_9, %c0_10, %c0_11, %c0_12] : memref<2x2x32x32xf32, #tpu.memory_space<vmem>>, vector<1x1x32x32xf32>
    %12 = vector.shape_cast %11 : vector<1x1x32x32xf32> to vector<32x32xf32>
    %cst_13 = arith.constant dense<0.000000e+00> : vector<8x32xf32>
    %13 = tpu.matmul %10, %12, %cst_13 {dimension_numbers = #tpu.dot_dimension_numbers<[1], [0], [0], [1], [0, 0, 1, 1], [], []>} : vector<8x32xf32>, vector<32x32xf32>, vector<8x32xf32> -> vector<8x32xf32>
    %c0_14 = arith.constant 0 : index
    %c0_15 = arith.constant 0 : index
    %c0_16 = arith.constant 0 : index
    %c0_17 = arith.constant 0 : index
    %14 = vector.load %arg6[%c0_14, %c0_15, %c0_16, %c0_17] : memref<2x2x1x32xf32, #tpu.memory_space<vmem>>, vector<1x1x1x32xf32>
    %15 = vector.shape_cast %14 : vector<1x1x1x32xf32> to vector<1x32xf32>
    %16 = vector.broadcast %15 : vector<1x32xf32> to vector<8x32xf32>
    %17 = arith.addf %13, %16 : vector<8x32xf32>
    %cst_18 = arith.constant 0.000000e+00 : f32
    %18 = vector.broadcast %cst_18 : f32 to vector<8x32xf32>
    %19 = arith.maximumf %17, %18 : vector<8x32xf32>
    %c0_19 = arith.constant 0 : index
    %c1 = arith.constant 1 : index
    %c0_20 = arith.constant 0 : index
    %c0_21 = arith.constant 0 : index
    %20 = vector.load %arg5[%c0_19, %c1, %c0_20, %c0_21] : memref<2x2x32x32xf32, #tpu.memory_space<vmem>>, vector<1x1x32x32xf32>
    %21 = vector.shape_cast %20 : vector<1x1x32x32xf32> to vector<32x32xf32>
    %cst_22 = arith.constant dense<0.000000e+00> : vector<8x32xf32>
    %22 = tpu.matmul %19, %21, %cst_22 {dimension_numbers = #tpu.dot_dimension_numbers<[1], [0], [0], [1], [0, 0, 1, 1], [], []>} : vector<8x32xf32>, vector<32x32xf32>, vector<8x32xf32> -> vector<8x32xf32>
    %c0_23 = arith.constant 0 : index
    %c1_24 = arith.constant 1 : index
    %c0_25 = arith.constant 0 : index
    %c0_26 = arith.constant 0 : index
    %23 = vector.load %arg6[%c0_23, %c1_24, %c0_25, %c0_26] : memref<2x2x1x32xf32, #tpu.memory_space<vmem>>, vector<1x1x1x32xf32>
    %24 = vector.shape_cast %23 : vector<1x1x1x32xf32> to vector<1x32xf32>
    %25 = vector.broadcast %24 : vector<1x32xf32> to vector<8x32xf32>
    %26 = arith.addf %22, %25 : vector<8x32xf32>
    %cst_27 = arith.constant 0.000000e+00 : f32
    %27 = vector.broadcast %cst_27 : f32 to vector<8x32xf32>
    %28 = arith.maximumf %26, %27 : vector<8x32xf32>
    %c0_28 = arith.constant 0 : index
    %c0_29 = arith.constant 0 : index
    %c0_30 = arith.constant 0 : index
    %29 = vector.load %arg7[%c0_28, %c0_29, %c0_30] : memref<2x32x32xf32, #tpu.memory_space<vmem>>, vector<1x32x32xf32>
    %30 = vector.shape_cast %29 : vector<1x32x32xf32> to vector<32x32xf32>
    %cst_31 = arith.constant dense<0.000000e+00> : vector<8x32xf32>
    %31 = tpu.matmul %28, %30, %cst_31 {dimension_numbers = #tpu.dot_dimension_numbers<[1], [0], [0], [1], [0, 0, 1, 1], [], []>} : vector<8x32xf32>, vector<32x32xf32>, vector<8x32xf32> -> vector<8x32xf32>
    %c0_32 = arith.constant 0 : index
    %c0_33 = arith.constant 0 : index
    %c0_34 = arith.constant 0 : index
    %32 = vector.load %arg8[%c0_32, %c0_33, %c0_34] : memref<2x1x32xf32, #tpu.memory_space<vmem>>, vector<1x1x32xf32>
    %33 = vector.shape_cast %32 : vector<1x1x32xf32> to vector<1x32xf32>
    %34 = vector.broadcast %33 : vector<1x32xf32> to vector<8x32xf32>
    %35 = arith.addf %31, %34 : vector<8x32xf32>
    %c0_35 = arith.constant 0 : index
    %c0_36 = arith.constant 0 : index
    %c0_37 = arith.constant 0 : index
    %36 = vector.load %arg9[%c0_35, %c0_36, %c0_37] : memref<2x1x16xf32, #tpu.memory_space<vmem>>, vector<1x1x16xf32>
    %37 = vector.shape_cast %36 : vector<1x1x16xf32> to vector<1x16xf32>
    %38 = vector.extract_strided_slice %35 {offsets = [0, 0], sizes = [8, 16], strides = [1, 1]} : vector<8x32xf32> to vector<8x16xf32>
    %39 = math.tanh %38 : vector<8x16xf32>
    %40 = vector.broadcast %37 : vector<1x16xf32> to vector<8x16xf32>
    %41 = arith.mulf %40, %39 : vector<8x16xf32>
    %42 = vector.extract_strided_slice %35 {offsets = [0, 16], sizes = [8, 16], strides = [1, 1]} : vector<8x32xf32> to vector<8x16xf32>
    %43 = math.exp %41 : vector<8x16xf32>
    %44 = arith.mulf %0, %43 : vector<8x16xf32>
    %45 = arith.addf %44, %42 : vector<8x16xf32>
    %cst_38 = arith.constant dense<0.000000e+00> : vector<8xf32>
    %46 = vector.multi_reduction <add>, %41, %cst_38 [1] : vector<8x16xf32> to vector<8xf32>
    %47 = vector.shape_cast %46 : vector<8xf32> to vector<8x1xf32>
    %48 = arith.addf %1, %47 : vector<8x1xf32>
    %c1_39 = arith.constant 1 : index
    %c0_40 = arith.constant 0 : index
    %c0_41 = arith.constant 0 : index
    %49 = vector.load %arg3[%c1_39, %c0_40, %c0_41] : memref<2x16x32xf32, #tpu.memory_space<vmem>>, vector<1x16x32xf32>
    %50 = vector.shape_cast %49 : vector<1x16x32xf32> to vector<16x32xf32>
    %cst_42 = arith.constant dense<0.000000e+00> : vector<8x32xf32>
    %51 = tpu.matmul %45, %50, %cst_42 {dimension_numbers = #tpu.dot_dimension_numbers<[1], [0], [0], [1], [0, 0, 1, 1], [], []>} : vector<8x16xf32>, vector<16x32xf32>, vector<8x32xf32> -> vector<8x32xf32>
    %c1_43 = arith.constant 1 : index
    %c0_44 = arith.constant 0 : index
    %c0_45 = arith.constant 0 : index
    %52 = vector.load %arg4[%c1_43, %c0_44, %c0_45] : memref<2x1x32xf32, #tpu.memory_space<vmem>>, vector<1x1x32xf32>
    %53 = vector.shape_cast %52 : vector<1x1x32xf32> to vector<1x32xf32>
    %54 = vector.broadcast %53 : vector<1x32xf32> to vector<8x32xf32>
    %55 = arith.addf %51, %54 : vector<8x32xf32>
    %cst_46 = arith.constant 0.000000e+00 : f32
    %56 = vector.broadcast %cst_46 : f32 to vector<8x32xf32>
    %57 = arith.maximumf %55, %56 : vector<8x32xf32>
    %c1_47 = arith.constant 1 : index
    %c0_48 = arith.constant 0 : index
    %c0_49 = arith.constant 0 : index
    %c0_50 = arith.constant 0 : index
    %58 = vector.load %arg5[%c1_47, %c0_48, %c0_49, %c0_50] : memref<2x2x32x32xf32, #tpu.memory_space<vmem>>, vector<1x1x32x32xf32>
    %59 = vector.shape_cast %58 : vector<1x1x32x32xf32> to vector<32x32xf32>
    %cst_51 = arith.constant dense<0.000000e+00> : vector<8x32xf32>
    %60 = tpu.matmul %57, %59, %cst_51 {dimension_numbers = #tpu.dot_dimension_numbers<[1], [0], [0], [1], [0, 0, 1, 1], [], []>} : vector<8x32xf32>, vector<32x32xf32>, vector<8x32xf32> -> vector<8x32xf32>
    %c1_52 = arith.constant 1 : index
    %c0_53 = arith.constant 0 : index
    %c0_54 = arith.constant 0 : index
    %c0_55 = arith.constant 0 : index
    %61 = vector.load %arg6[%c1_52, %c0_53, %c0_54, %c0_55] : memref<2x2x1x32xf32, #tpu.memory_space<vmem>>, vector<1x1x1x32xf32>
    %62 = vector.shape_cast %61 : vector<1x1x1x32xf32> to vector<1x32xf32>
    %63 = vector.broadcast %62 : vector<1x32xf32> to vector<8x32xf32>
    %64 = arith.addf %60, %63 : vector<8x32xf32>
    %cst_56 = arith.constant 0.000000e+00 : f32
    %65 = vector.broadcast %cst_56 : f32 to vector<8x32xf32>
    %66 = arith.maximumf %64, %65 : vector<8x32xf32>
    %c1_57 = arith.constant 1 : index
    %c1_58 = arith.constant 1 : index
    %c0_59 = arith.constant 0 : index
    %c0_60 = arith.constant 0 : index
    %67 = vector.load %arg5[%c1_57, %c1_58, %c0_59, %c0_60] : memref<2x2x32x32xf32, #tpu.memory_space<vmem>>, vector<1x1x32x32xf32>
    %68 = vector.shape_cast %67 : vector<1x1x32x32xf32> to vector<32x32xf32>
    %cst_61 = arith.constant dense<0.000000e+00> : vector<8x32xf32>
    %69 = tpu.matmul %66, %68, %cst_61 {dimension_numbers = #tpu.dot_dimension_numbers<[1], [0], [0], [1], [0, 0, 1, 1], [], []>} : vector<8x32xf32>, vector<32x32xf32>, vector<8x32xf32> -> vector<8x32xf32>
    %c1_62 = arith.constant 1 : index
    %c1_63 = arith.constant 1 : index
    %c0_64 = arith.constant 0 : index
    %c0_65 = arith.constant 0 : index
    %70 = vector.load %arg6[%c1_62, %c1_63, %c0_64, %c0_65] : memref<2x2x1x32xf32, #tpu.memory_space<vmem>>, vector<1x1x1x32xf32>
    %71 = vector.shape_cast %70 : vector<1x1x1x32xf32> to vector<1x32xf32>
    %72 = vector.broadcast %71 : vector<1x32xf32> to vector<8x32xf32>
    %73 = arith.addf %69, %72 : vector<8x32xf32>
    %cst_66 = arith.constant 0.000000e+00 : f32
    %74 = vector.broadcast %cst_66 : f32 to vector<8x32xf32>
    %75 = arith.maximumf %73, %74 : vector<8x32xf32>
    %c1_67 = arith.constant 1 : index
    %c0_68 = arith.constant 0 : index
    %c0_69 = arith.constant 0 : index
    %76 = vector.load %arg7[%c1_67, %c0_68, %c0_69] : memref<2x32x32xf32, #tpu.memory_space<vmem>>, vector<1x32x32xf32>
    %77 = vector.shape_cast %76 : vector<1x32x32xf32> to vector<32x32xf32>
    %cst_70 = arith.constant dense<0.000000e+00> : vector<8x32xf32>
    %78 = tpu.matmul %75, %77, %cst_70 {dimension_numbers = #tpu.dot_dimension_numbers<[1], [0], [0], [1], [0, 0, 1, 1], [], []>} : vector<8x32xf32>, vector<32x32xf32>, vector<8x32xf32> -> vector<8x32xf32>
    %c1_71 = arith.constant 1 : index
    %c0_72 = arith.constant 0 : index
    %c0_73 = arith.constant 0 : index
    %79 = vector.load %arg8[%c1_71, %c0_72, %c0_73] : memref<2x1x32xf32, #tpu.memory_space<vmem>>, vector<1x1x32xf32>
    %80 = vector.shape_cast %79 : vector<1x1x32xf32> to vector<1x32xf32>
    %81 = vector.broadcast %80 : vector<1x32xf32> to vector<8x32xf32>
    %82 = arith.addf %78, %81 : vector<8x32xf32>
    %c1_74 = arith.constant 1 : index
    %c0_75 = arith.constant 0 : index
    %c0_76 = arith.constant 0 : index
    %83 = vector.load %arg9[%c1_74, %c0_75, %c0_76] : memref<2x1x16xf32, #tpu.memory_space<vmem>>, vector<1x1x16xf32>
    %84 = vector.shape_cast %83 : vector<1x1x16xf32> to vector<1x16xf32>
    %85 = vector.extract_strided_slice %82 {offsets = [0, 0], sizes = [8, 16], strides = [1, 1]} : vector<8x32xf32> to vector<8x16xf32>
    %86 = math.tanh %85 : vector<8x16xf32>
    %87 = vector.broadcast %84 : vector<1x16xf32> to vector<8x16xf32>
    %88 = arith.mulf %87, %86 : vector<8x16xf32>
    %89 = vector.extract_strided_slice %82 {offsets = [0, 16], sizes = [8, 16], strides = [1, 1]} : vector<8x32xf32> to vector<8x16xf32>
    %90 = math.exp %88 : vector<8x16xf32>
    %91 = arith.mulf %45, %90 : vector<8x16xf32>
    %92 = arith.addf %91, %89 : vector<8x16xf32>
    %cst_77 = arith.constant dense<0.000000e+00> : vector<8xf32>
    %93 = vector.multi_reduction <add>, %88, %cst_77 [1] : vector<8x16xf32> to vector<8xf32>
    %94 = vector.shape_cast %93 : vector<8xf32> to vector<8x1xf32>
    %95 = arith.addf %48, %94 : vector<8x1xf32>
    %c0_78 = arith.constant 0 : index
    %c0_79 = arith.constant 0 : index
    %96 = vector.load %arg10[%c0_78, %c0_79] : memref<16x32xf32, #tpu.memory_space<vmem>>, vector<16x32xf32>
    %cst_80 = arith.constant dense<0.000000e+00> : vector<8x32xf32>
    %97 = tpu.matmul %92, %96, %cst_80 {dimension_numbers = #tpu.dot_dimension_numbers<[1], [0], [0], [1], [0, 0, 1, 1], [], []>} : vector<8x16xf32>, vector<16x32xf32>, vector<8x32xf32> -> vector<8x32xf32>
    %c0_81 = arith.constant 0 : index
    %c0_82 = arith.constant 0 : index
    %98 = vector.load %arg11[%c0_81, %c0_82] : memref<1x32xf32, #tpu.memory_space<vmem>>, vector<1x32xf32>
    %99 = vector.broadcast %98 : vector<1x32xf32> to vector<8x32xf32>
    %100 = arith.addf %97, %99 : vector<8x32xf32>
    %101 = vector.extract_strided_slice %100 {offsets = [0, 0], sizes = [8, 16], strides = [1, 1]} : vector<8x32xf32> to vector<8x16xf32>
    %102 = vector.extract_strided_slice %100 {offsets = [0, 16], sizes = [8, 16], strides = [1, 1]} : vector<8x32xf32> to vector<8x16xf32>
    %cst_83 = arith.constant 5.000000e-01 : f32
    %103 = vector.broadcast %cst_83 : f32 to vector<8x16xf32>
    %104 = arith.mulf %103, %102 : vector<8x16xf32>
    %105 = math.exp %104 : vector<8x16xf32>
    %c0_84 = arith.constant 0 : index
    %c0_85 = arith.constant 0 : index
    %106 = vector.load %arg2[%c0_84, %c0_85] : memref<8x16xf32, #tpu.memory_space<vmem>>, vector<8x16xf32>
    %107 = arith.mulf %106, %105 : vector<8x16xf32>
    %108 = arith.addf %107, %101 : vector<8x16xf32>
    %c0_86 = arith.constant 0 : index
    %c0_87 = arith.constant 0 : index
    %109 = vector.load %arg12[%c0_86, %c0_87] : memref<16x4xf32, #tpu.memory_space<vmem>>, vector<16x4xf32>
    %cst_88 = arith.constant dense<0.000000e+00> : vector<8x4xf32>
    %110 = tpu.matmul %108, %109, %cst_88 {dimension_numbers = #tpu.dot_dimension_numbers<[1], [0], [0], [1], [0, 0, 1, 1], [], []>} : vector<8x16xf32>, vector<16x4xf32>, vector<8x4xf32> -> vector<8x4xf32>
    %c0_89 = arith.constant 0 : index
    %c0_90 = arith.constant 0 : index
    %111 = vector.load %arg13[%c0_89, %c0_90] : memref<1x4xf32, #tpu.memory_space<vmem>>, vector<1x4xf32>
    %112 = vector.broadcast %111 : vector<1x4xf32> to vector<8x4xf32>
    %113 = arith.addf %110, %112 : vector<8x4xf32>
    %cst_91 = arith.constant dense<0xFF800000> : vector<8xf32>
    %114 = vector.multi_reduction <maximumf>, %113, %cst_91 [1] : vector<8x4xf32> to vector<8xf32>
    %115 = vector.shape_cast %114 : vector<8xf32> to vector<8x1xf32>
    %116 = vector.broadcast %115 : vector<8x1xf32> to vector<8x4xf32>
    %117 = arith.subf %113, %116 : vector<8x4xf32>
    %118 = math.exp %117 : vector<8x4xf32>
    %cst_92 = arith.constant dense<0.000000e+00> : vector<8xf32>
    %119 = vector.multi_reduction <add>, %118, %cst_92 [1] : vector<8x4xf32> to vector<8xf32>
    %120 = vector.shape_cast %119 : vector<8xf32> to vector<8x1xf32>
    %121 = vector.broadcast %120 : vector<8x1xf32> to vector<8x4xf32>
    %122 = arith.divf %118, %121 : vector<8x4xf32>
    %cst_93 = arith.constant 0.000000e+00 : f32
    %123 = vector.broadcast %cst_93 : f32 to vector<8x75xf32>
    %124 = tpu.concatenate %92, %101, %102, %95, %122, %123 in 1 : vector<8x16xf32>, vector<8x16xf32>, vector<8x16xf32>, vector<8x1xf32>, vector<8x4xf32>, vector<8x75xf32> -> vector<8x128xf32>
    %c0_94 = arith.constant 0 : index
    %c0_95 = arith.constant 0 : index
    %125 = vector.load %arg14[%c0_94, %c0_95] : memref<8x128xf32, #tpu.memory_space<vmem>>, vector<8x128xf32>
    tpu.vector_store %arg14[%c0_94, %c0_95], %124 {strides = array<i32>} : memref<8x128xf32, #tpu.memory_space<vmem>>, vector<8x128xf32>,
    return
  }
  func.func @transform_0(%arg0: i32) -> (i32, i32) {
    %c0_i32 = arith.constant 0 : i32
    %c0_i32_0 = arith.constant 0 : i32
    return %arg0, %c0_i32 : i32, i32
  }
  func.func @transform_1(%arg0: i32) -> (i32, i32) {
    %c0_i32 = arith.constant 0 : i32
    %c0_i32_0 = arith.constant 0 : i32
    return %arg0, %c0_i32 : i32, i32
  }
  func.func @transform_2(%arg0: i32) -> (i32, i32, i32) {
    %c0_i32 = arith.constant 0 : i32
    %c0_i32_0 = arith.constant 0 : i32
    %c0_i32_1 = arith.constant 0 : i32
    %c0_i32_2 = arith.constant 0 : i32
    return %c0_i32, %c0_i32_0, %c0_i32_1 : i32, i32, i32
  }
  func.func @transform_3(%arg0: i32) -> (i32, i32, i32) {
    %c0_i32 = arith.constant 0 : i32
    %c0_i32_0 = arith.constant 0 : i32
    %c0_i32_1 = arith.constant 0 : i32
    %c0_i32_2 = arith.constant 0 : i32
    return %c0_i32, %c0_i32_0, %c0_i32_1 : i32, i32, i32
  }
  func.func @transform_4(%arg0: i32) -> (i32, i32, i32, i32) {
    %c0_i32 = arith.constant 0 : i32
    %c0_i32_0 = arith.constant 0 : i32
    %c0_i32_1 = arith.constant 0 : i32
    %c0_i32_2 = arith.constant 0 : i32
    %c0_i32_3 = arith.constant 0 : i32
    return %c0_i32, %c0_i32_0, %c0_i32_1, %c0_i32_2 : i32, i32, i32, i32
  }
  func.func @transform_5(%arg0: i32) -> (i32, i32, i32, i32) {
    %c0_i32 = arith.constant 0 : i32
    %c0_i32_0 = arith.constant 0 : i32
    %c0_i32_1 = arith.constant 0 : i32
    %c0_i32_2 = arith.constant 0 : i32
    %c0_i32_3 = arith.constant 0 : i32
    return %c0_i32, %c0_i32_0, %c0_i32_1, %c0_i32_2 : i32, i32, i32, i32
  }
  func.func @transform_6(%arg0: i32) -> (i32, i32, i32) {
    %c0_i32 = arith.constant 0 : i32
    %c0_i32_0 = arith.constant 0 : i32
    %c0_i32_1 = arith.constant 0 : i32
    %c0_i32_2 = arith.constant 0 : i32
    return %c0_i32, %c0_i32_0, %c0_i32_1 : i32, i32, i32
  }
  func.func @transform_7(%arg0: i32) -> (i32, i32, i32) {
    %c0_i32 = arith.constant 0 : i32
    %c0_i32_0 = arith.constant 0 : i32
    %c0_i32_1 = arith.constant 0 : i32
    %c0_i32_2 = arith.constant 0 : i32
    return %c0_i32, %c0_i32_0, %c0_i32_1 : i32, i32, i32
  }
  func.func @transform_8(%arg0: i32) -> (i32, i32, i32) {
    %c0_i32 = arith.constant 0 : i32
    %c0_i32_0 = arith.constant 0 : i32
    %c0_i32_1 = arith.constant 0 : i32
    %c0_i32_2 = arith.constant 0 : i32
    return %c0_i32, %c0_i32_0, %c0_i32_1 : i32, i32, i32
  }
  func.func @transform_9(%arg0: i32) -> (i32, i32) {
    %c0_i32 = arith.constant 0 : i32
    %c0_i32_0 = arith.constant 0 : i32
    %c0_i32_1 = arith.constant 0 : i32
    return %c0_i32, %c0_i32_0 : i32, i32
  }
  func.func @transform_10(%arg0: i32) -> (i32, i32) {
    %c0_i32 = arith.constant 0 : i32
    %c0_i32_0 = arith.constant 0 : i32
    %c0_i32_1 = arith.constant 0 : i32
    return %c0_i32, %c0_i32_0 : i32, i32
  }
  func.func @transform_11(%arg0: i32) -> (i32, i32) {
    %c0_i32 = arith.constant 0 : i32
    %c0_i32_0 = arith.constant 0 : i32
    %c0_i32_1 = arith.constant 0 : i32
    return %c0_i32, %c0_i32_0 : i32, i32
  }
  func.func @transform_12(%arg0: i32) -> (i32, i32) {
    %c0_i32 = arith.constant 0 : i32
    %c0_i32_0 = arith.constant 0 : i32
    %c0_i32_1 = arith.constant 0 : i32
    return %c0_i32, %c0_i32_0 : i32, i32
  }
  func.func @transform_13(%arg0: i32) -> (i32, i32) {
    %c0_i32 = arith.constant 0 : i32
    %c0_i32_0 = arith.constant 0 : i32
    return %arg0, %c0_i32 : i32, i32
  }
}

</mosaic_0001>

<llo_original>
// kernel: tpu_custom_call.1
$region0: #{tpu_custom_call.1}
  #allocation0 [shape = 'u32[]', space=smem, size = 0x4, offset = 0x4, fixed_abs, tag = 'smem constant byte address 0x4 - core index']
  #allocation1 [shape = 'u32[144,128]{1,0:T(1,128)}', space=vmem, size = 0x12000, scoped, tag = 'internal scratch']
  %s0 = inlined_call_operand.vmem [shape: f32[8,16], index: 0, kind: input, shape index: {}]
  %s1 = inlined_call_operand.hbm [shape: f32[8,16], index: 1, kind: input, shape index: {}]
  %s2 = inlined_call_operand.hbm [shape: f32[2,16,32], index: 2, kind: input, shape index: {}]
  %s3 = inlined_call_operand.vmem [shape: f32[2,1,32], index: 3, kind: input, shape index: {}]
  %s4 = inlined_call_operand.hbm [shape: f32[2,2,32,32], index: 4, kind: input, shape index: {}]
  %s5 = inlined_call_operand.vmem [shape: f32[2,2,1,32], index: 5, kind: input, shape index: {}]
  %s6 = inlined_call_operand.hbm [shape: f32[2,32,32], index: 6, kind: input, shape index: {}]
  %s7 = inlined_call_operand.vmem [shape: f32[2,1,32], index: 7, kind: input, shape index: {}]
  %s8 = inlined_call_operand.vmem [shape: f32[2,1,16], index: 8, kind: input, shape index: {}]
  %s9 = inlined_call_operand.vmem [shape: f32[16,32], index: 9, kind: input, shape index: {}]
  %s10 = inlined_call_operand.vmem [shape: f32[1,32], index: 10, kind: input, shape index: {}]
  %s11 = inlined_call_operand.vmem [shape: f32[16,4], index: 11, kind: input, shape index: {}]
  %s12 = inlined_call_operand.vmem [shape: f32[1,4], index: 12, kind: input, shape index: {}]
  %s13 = inlined_call_operand.hbm [shape: f32[8,128], index: 13, kind: output, shape index: {}]
  %s14 = sld [smem:[#allocation0]]
  $region78: #{tpu_custom_call.1} parent=0
    _
  %s16 = ssub.s32 1, %s14
  %s17 = scalar_select 0, %s16, %s14
  $region1: #{tpu_custom_call.1} parent=0
    #allocation2 [shape = 'u8[4096]{0}', space=vmem, size = 0x1000, scoped, tag = 'input window, operand 1, single buffered']
    #allocation3 [shape = 's32[1]{0}', space=sflag, size = 0x4, scoped, tag = 'scoped memory for tpu_custom_call.1']
    #allocation4 [shape = 's32[1]{0}', space=sflag, size = 0x4, scoped, tag = 'scoped memory for tpu_custom_call.1']
    #allocation5 [shape = 'u8[16384]{0}', space=vmem, size = 0x4000, scoped, tag = 'input window, operand 2, single buffered']
    #allocation6 [shape = 's32[1]{0}', space=sflag, size = 0x4, scoped, tag = 'scoped memory for tpu_custom_call.1']
    #allocation7 [shape = 'u8[65536]{0}', space=vmem, size = 0x10000, scoped, tag = 'input window, operand 4, single buffered']
    #allocation8 [shape = 'u8[32768]{0}', space=vmem, size = 0x8000, scoped, tag = 'input window, operand 6, single buffered']
    #allocation9 [shape = 's32[1]{0}', space=sflag, size = 0x4, scoped, tag = 'scoped memory for tpu_custom_call.1']
    #allocation10 [shape = 'u8[4096]{0}', space=vmem, size = 0x1000, scoped, tag = 'output window, operand 0, single buffered']
    %18 = vsyncpa [#allocation3], 0
    %19 = vsyncpa [#allocation6], 0
    %20 = vsyncpa [#allocation9], 0
    %21 = vsyncpa [#allocation4], 0
    // Predicated region
    $region2: #{tpu_custom_call.1} parent=1 // pred_check
      _
    $region3: #{tpu_custom_call.1} parent=1 // pred_check_branch
      %23 = sbr.rel (0) target = $region5
    $region4: #{tpu_custom_call.1} parent=1 // pred_region
      _
    $region5: #{tpu_custom_call.1} parent=1 // pred_fallthru
      _
    // Predicated region
    $region6: #{tpu_custom_call.1} parent=1 // pred_check
      _
    $region7: #{tpu_custom_call.1} parent=1 // pred_check_branch
      %25 = sbr.rel (0) target = $region9
    $region8: #{tpu_custom_call.1} parent=1 // pred_region
      %s27 = ssub.s32 128, 128
      %28 = vsyncadd [#allocation3], %s27
      %s30 = sshll.u32 [#allocation2], 4
      %s31 = int_to_ptr.vmem [resolvable:$true] %s30
      %33 = dma.hbm_to_vmem [thread:$0]  %s1, 128, %s31, [#allocation3]
    $region9: #{tpu_custom_call.1} parent=1 // pred_fallthru
      _
    // Predicated region
    $region10: #{tpu_custom_call.1} parent=1 // pred_check
      _
    $region11: #{tpu_custom_call.1} parent=1 // pred_check_branch
      %35 = sbr.rel (0) target = $region13
    $region12: #{tpu_custom_call.1} parent=1 // pred_region
      %s37 = ssub.s32 512, 512
      %38 = vsyncadd [#allocation6], %s37
      %s39 = sshll.u32 [#allocation5], 4
      %s40 = int_to_ptr.vmem [resolvable:$true] %s39
      %45 = dma.hbm_to_vmem [thread:$0]  %s2, 512, %s40, [#allocation6], 128, 128, 8
    $region13: #{tpu_custom_call.1} parent=1 // pred_fallthru
      _
    // Predicated region
    $region14: #{tpu_custom_call.1} parent=1 // pred_check
      _
    $region15: #{tpu_custom_call.1} parent=1 // pred_check_branch
      %47 = sbr.rel (0) target = $region17
    $region16: #{tpu_custom_call.1} parent=1 // pred_region
      _
    $region17: #{tpu_custom_call.1} parent=1 // pred_fallthru
      _
    // Predicated region
    $region18: #{tpu_custom_call.1} parent=1 // pred_check
      _
    $region19: #{tpu_custom_call.1} parent=1 // pred_check_branch
      %49 = sbr.rel (0) target = $region21
    $region20: #{tpu_custom_call.1} parent=1 // pred_region
      %s51 = ssub.s32 2048, 2048
      %52 = vsyncadd [#allocation6], %s51
      %s53 = sshll.u32 [#allocation7], 4
      %s54 = int_to_ptr.vmem [resolvable:$true] %s53
      %59 = dma.hbm_to_vmem [thread:$0]  %s4, 2048, %s54, [#allocation6], 128, 128, 8
    $region21: #{tpu_custom_call.1} parent=1 // pred_fallthru
      _
    // Predicated region
    $region22: #{tpu_custom_call.1} parent=1 // pred_check
      _
    $region23: #{tpu_custom_call.1} parent=1 // pred_check_branch
      %61 = sbr.rel (0) target = $region25
    $region24: #{tpu_custom_call.1} parent=1 // pred_region
      _
    $region25: #{tpu_custom_call.1} parent=1 // pred_fallthru
      _
    // Predicated region
    $region26: #{tpu_custom_call.1} parent=1 // pred_check
      _
    $region27: #{tpu_custom_call.1} parent=1 // pred_check_branch
      %63 = sbr.rel (0) target = $region29
    $region28: #{tpu_custom_call.1} parent=1 // pred_region
      %s65 = ssub.s32 1024, 1024
      %66 = vsyncadd [#allocation9], %s65
      %s67 = sshll.u32 [#allocation8], 4
      %s68 = int_to_ptr.vmem [resolvable:$true] %s67
      %73 = dma.hbm_to_vmem [thread:$0]  %s6, 1024, %s68, [#allocation9], 128, 128, 8
    $region29: #{tpu_custom_call.1} parent=1 // pred_fallthru
      _
    // Predicated region
    $region30: #{tpu_custom_call.1} parent=1 // pred_check
      _
    $region31: #{tpu_custom_call.1} parent=1 // pred_check_branch
      %75 = sbr.rel (0) target = $region33
    $region32: #{tpu_custom_call.1} parent=1 // pred_region
      _
    $region33: #{tpu_custom_call.1} parent=1 // pred_fallthru
      _
    // Predicated region
    $region34: #{tpu_custom_call.1} parent=1 // pred_check
      _
    $region35: #{tpu_custom_call.1} parent=1 // pred_check_branch
      %77 = sbr.rel (0) target = $region37
    $region36: #{tpu_custom_call.1} parent=1 // pred_region
      _
    $region37: #{tpu_custom_call.1} parent=1 // pred_fallthru
      _
    // Predicated region
    $region38: #{tpu_custom_call.1} parent=1 // pred_check
      _
    $region39: #{tpu_custom_call.1} parent=1 // pred_check_branch
      %79 = sbr.rel (0) target = $region41
    $region40: #{tpu_custom_call.1} parent=1 // pred_region
      _
    $region41: #{tpu_custom_call.1} parent=1 // pred_fallthru
      _
    // Predicated region
    $region42: #{tpu_custom_call.1} parent=1 // pred_check
      _
    $region43: #{tpu_custom_call.1} parent=1 // pred_check_branch
      %81 = sbr.rel (0) target = $region45
    $region44: #{tpu_custom_call.1} parent=1 // pred_region
      _
    $region45: #{tpu_custom_call.1} parent=1 // pred_fallthru
      _
    // Predicated region
    $region46: #{tpu_custom_call.1} parent=1 // pred_check
      _
    $region47: #{tpu_custom_call.1} parent=1 // pred_check_branch
      %83 = sbr.rel (0) target = $region49
    $region48: #{tpu_custom_call.1} parent=1 // pred_region
      _
    $region49: #{tpu_custom_call.1} parent=1 // pred_fallthru
      _
    // Predicated region
    $region50: #{tpu_custom_call.1} parent=1 // pred_check
      _
    $region51: #{tpu_custom_call.1} parent=1 // pred_check_branch
      %85 = sbr.rel (0) target = $region53
    $region52: #{tpu_custom_call.1} parent=1 // pred_region
      _
    $region53: #{tpu_custom_call.1} parent=1 // pred_fallthru
      _
    // Predicated region
    $region54: #{tpu_custom_call.1} parent=1 // pred_check
      _
    $region55: #{tpu_custom_call.1} parent=1 // pred_check_branch
      %87 = sbr.rel (0) target = $region57
    $region56: #{tpu_custom_call.1} parent=1 // pred_region
      %88 = dma.done [#allocation3], 128
    $region57: #{tpu_custom_call.1} parent=1 // pred_fallthru
      _
    // Predicated region
    $region58: #{tpu_custom_call.1} parent=1 // pred_check
      _
    $region59: #{tpu_custom_call.1} parent=1 // pred_check_branch
      %90 = sbr.rel (0) target = $region61
    $region60: #{tpu_custom_call.1} parent=1 // pred_region
      %91 = dma.done [#allocation6], 512
    $region61: #{tpu_custom_call.1} parent=1 // pred_fallthru
      _
    // Predicated region
    $region62: #{tpu_custom_call.1} parent=1 // pred_check
      _
    $region63: #{tpu_custom_call.1} parent=1 // pred_check_branch
      %93 = sbr.rel (0) target = $region65
    $region64: #{tpu_custom_call.1} parent=1 // pred_region
      %94 = dma.done [#allocation6], 2048
    $region65: #{tpu_custom_call.1} parent=1 // pred_fallthru
      _
    // Predicated region
    $region66: #{tpu_custom_call.1} parent=1 // pred_check
      _
    $region67: #{tpu_custom_call.1} parent=1 // pred_check_branch
      %96 = sbr.rel (0) target = $region69
    $region68: #{tpu_custom_call.1} parent=1 // pred_region
      %97 = dma.done [#allocation9], 1024
    $region69: #{tpu_custom_call.1} parent=1 // pred_fallthru
      _
    %v98 = vld [vmem:[%s0] sm:$0xff]
    %v99 = vld [vmem:[#allocation5] sm:$0xff]
    %v100 = vld [vmem:[#allocation5 + $0x8] sm:$0xff]
    %v101 = vld [vmem:[%s3] sm:$0x1]
    %v103 = vlaneseq
    %v104 = vshrl.u32 %v103, 7
    %v105 = vsub.s32 0, %v104
    %v106 = vrot.slane %v101, %v105
    %vm108 = vcmask 130048
    %v110 = vsel %vm108, %v98, 0
    %112 = vmatprep.subr.mxu0 0.0
    %113 = vmatpush1.msra.mxu0 %v99
    %114 = vmatprep.subr.mxu0 0.0
    %115 = vmatpush1.msra.mxu0 %v100
    %116 = vmatprep.subr.mxu0 0.0
    %117 = vmatpush1.msra.mxu0 0.0
    %118 = vmatprep.subr.mxu0 0.0
    %119 = vmatpush1.msra.mxu0 0.0
    %120 = vmatprep.subr.mxu0 0.0
    %121 = vmatpush1.msra.mxu0 0.0
    %122 = vmatprep.subr.mxu0 0.0
    %123 = vmatpush1.msra.mxu0 0.0
    %124 = vmatprep.subr.mxu0 0.0
    %125 = vmatpush1.msra.mxu0 0.0
    %126 = vmatprep.subr.mxu0 0.0
    %127 = vmatpush1.msra.mxu0 0.0
    %128 = vmatprep.subr.mxu0 0.0
    %129 = vmatpush1.msra.mxu0 0.0
    %130 = vmatprep.subr.mxu0 0.0
    %131 = vmatpush1.msra.mxu0 0.0
    %132 = vmatprep.subr.mxu0 0.0
    %133 = vmatpush1.msra.mxu0 0.0
    %134 = vmatprep.subr.mxu0 0.0
    %135 = vmatpush1.msra.mxu0 0.0
    %136 = vmatprep.subr.mxu0 0.0
    %137 = vmatpush1.msra.mxu0 0.0
    %138 = vmatprep.subr.mxu0 0.0
    %139 = vmatpush1.msra.mxu0 0.0
    %140 = vmatprep.subr.mxu0 0.0
    %141 = vmatpush1.msra.mxu0 0.0
    %142 = vmatprep.subr.mxu0 0.0
    %143 = vmatpush1.msra.mxu0 0.0
    %144 = vmatprep.subr.mxu0 0.0
    %145 = vmatpush1.msra.mxu0 0.0
    %146 = vmatprep.subr.mxu0 0.0
    %147 = vmatpush1.msra.mxu0 0.0
    %148 = vmatprep.subr.mxu0 0.0
    %149 = vmatpush1.msra.mxu0 0.0
    %150 = vmatprep.subr.mxu0 0.0
    %151 = vmatpush1.msra.mxu0 0.0
    %152 = vmatprep.subr.mxu0 0.0
    %153 = vmatpush1.msra.mxu0 0.0
    %154 = vmatprep.subr.mxu0 0.0
    %155 = vmatpush1.msra.mxu0 0.0
    %156 = vmatprep.subr.mxu0 0.0
    %157 = vmatpush1.msra.mxu0 0.0
    %158 = vmatprep.subr.mxu0 0.0
    %159 = vmatpush1.msra.mxu0 0.0
    %160 = vmatprep.subr.mxu0 0.0
    %161 = vmatpush1.msra.mxu0 0.0
    %162 = vmatprep.subr.mxu0 0.0
    %163 = vmatpush1.msra.mxu0 0.0
    %164 = vmatprep.subr.mxu0 0.0
    %165 = vmatpush1.msra.mxu0 0.0
    %166 = vmatprep.subr.mxu0 0.0
    %167 = vmatpush1.msra.mxu0 0.0
    %168 = vmatprep.subr.mxu0 0.0
    %169 = vmatpush1.msra.mxu0 0.0
    %170 = vmatprep.subr.mxu0 0.0
    %171 = vmatpush1.msra.mxu0 0.0
    %172 = vmatprep.subr.mxu0 0.0
    %173 = vmatpush1.msra.mxu0 0.0
    %174 = vmatprep.subr.mxu0 0.0
    %175 = vmatpush1.msra.mxu0 0.0
    %176 = vmatprep.mubr.f32.mxu0 0.0
    %177 = vmatmul.mubr.f32.gmra.mrb[0].mxu0 %v110
    %v178 = vpop.f32.mrb[0].mxu0
    %v179 = vadd.f32 %v106, %v178
    %v180 = vpop.f32.mrb[0].mxu0
    %181 = vdwg.mxu0
    %v182 = vmax.f32 %v179, 0.0
    %v183 = vld [vmem:[#allocation7] sm:$0xff]
    %v184 = vld [vmem:[#allocation7 + $0x8] sm:$0xff]
    %v185 = vld [vmem:[#allocation7 + $0x10] sm:$0xff]
    %v186 = vld [vmem:[#allocation7 + $0x18] sm:$0xff]
    %v187 = vld [vmem:[%s5] sm:$0x1]
    %v189 = vlaneseq
    %v190 = vshrl.u32 %v189, 7
    %v191 = vsub.s32 0, %v190
    %v192 = vrot.slane %v187, %v191
    %vm194 = vcmask 261120
    %v196 = vsel %vm194, %v182, 0
    %198 = vmatprep.subr.mxu0 0.0
    %199 = vmatpush1.msra.mxu0 %v183
    %200 = vmatprep.subr.mxu0 0.0
    %201 = vmatpush1.msra.mxu0 %v184
    %202 = vmatprep.subr.mxu0 0.0
    %203 = vmatpush1.msra.mxu0 %v185
    %204 = vmatprep.subr.mxu0 0.0
    %205 = vmatpush1.msra.mxu0 %v186
    %206 = vmatprep.subr.mxu0 0.0
    %207 = vmatpush1.msra.mxu0 0.0
    %208 = vmatprep.subr.mxu0 0.0
    %209 = vmatpush1.msra.mxu0 0.0
    %210 = vmatprep.subr.mxu0 0.0
    %211 = vmatpush1.msra.mxu0 0.0
    %212 = vmatprep.subr.mxu0 0.0
    %213 = vmatpush1.msra.mxu0 0.0
    %214 = vmatprep.subr.mxu0 0.0
    %215 = vmatpush1.msra.mxu0 0.0
    %216 = vmatprep.subr.mxu0 0.0
    %217 = vmatpush1.msra.mxu0 0.0
    %218 = vmatprep.subr.mxu0 0.0
    %219 = vmatpush1.msra.mxu0 0.0
    %220 = vmatprep.subr.mxu0 0.0
    %221 = vmatpush1.msra.mxu0 0.0
    %222 = vmatprep.subr.mxu0 0.0
    %223 = vmatpush1.msra.mxu0 0.0
    %224 = vmatprep.subr.mxu0 0.0
    %225 = vmatpush1.msra.mxu0 0.0
    %226 = vmatprep.subr.mxu0 0.0
    %227 = vmatpush1.msra.mxu0 0.0
    %228 = vmatprep.subr.mxu0 0.0
    %229 = vmatpush1.msra.mxu0 0.0
    %230 = vmatprep.subr.mxu0 0.0
    %231 = vmatpush1.msra.mxu0 0.0
    %232 = vmatprep.subr.mxu0 0.0
    %233 = vmatpush1.msra.mxu0 0.0
    %234 = vmatprep.subr.mxu0 0.0
    %235 = vmatpush1.msra.mxu0 0.0
    %236 = vmatprep.subr.mxu0 0.0
    %237 = vmatpush1.msra.mxu0 0.0
    %238 = vmatprep.subr.mxu0 0.0
    %239 = vmatpush1.msra.mxu0 0.0
    %240 = vmatprep.subr.mxu0 0.0
    %241 = vmatpush1.msra.mxu0 0.0
    %242 = vmatprep.subr.mxu0 0.0
    %243 = vmatpush1.msra.mxu0 0.0
    %244 = vmatprep.subr.mxu0 0.0
    %245 = vmatpush1.msra.mxu0 0.0
    %246 = vmatprep.subr.mxu0 0.0
    %247 = vmatpush1.msra.mxu0 0.0
    %248 = vmatprep.subr.mxu0 0.0
    %249 = vmatpush1.msra.mxu0 0.0
    %250 = vmatprep.subr.mxu0 0.0
    %251 = vmatpush1.msra.mxu0 0.0
    %252 = vmatprep.subr.mxu0 0.0
    %253 = vmatpush1.msra.mxu0 0.0
    %254 = vmatprep.subr.mxu0 0.0
    %255 = vmatpush1.msra.mxu0 0.0
    %256 = vmatprep.subr.mxu0 0.0
    %257 = vmatpush1.msra.mxu0 0.0
    %258 = vmatprep.subr.mxu0 0.0
    %259 = vmatpush1.msra.mxu0 0.0
    %260 = vmatprep.subr.mxu0 0.0
    %261 = vmatpush1.msra.mxu0 0.0
    %262 = vmatprep.mubr.f32.mxu0 0.0
    %263 = vmatmul.mubr.f32.gmra.mrb[0].mxu0 %v196
    %v264 = vpop.f32.mrb[0].mxu0
    %v265 = vadd.f32 %v192, %v264
    %v266 = vpop.f32.mrb[0].mxu0
    %267 = vdwg.mxu0
    %v268 = vmax.f32 %v265, 0.0
    %s269 = scalar_lea.vmem [#allocation7], 32
    %v270 = vld [vmem:[%s269] sm:$0xff]
    %v271 = vld [vmem:[%s269 + $0x8] sm:$0xff]
    %v272 = vld [vmem:[%s269 + $0x10] sm:$0xff]
    %v273 = vld [vmem:[%s269 + $0x18] sm:$0xff]
    %s274 = scalar_lea.vmem %s5, 1
    %v275 = vld [vmem:[%s274] sm:$0x1]
    %v277 = vlaneseq
    %v278 = vshrl.u32 %v277, 7
    %v279 = vsub.s32 0, %v278
    %v280 = vrot.slane %v275, %v279
    %v283 = vsel %vm194, %v268, 0
    %285 = vmatprep.subr.mxu0 0.0
    %286 = vmatpush1.msra.mxu0 %v270
    %287 = vmatprep.subr.mxu0 0.0
    %288 = vmatpush1.msra.mxu0 %v271
    %289 = vmatprep.subr.mxu0 0.0
    %290 = vmatpush1.msra.mxu0 %v272
    %291 = vmatprep.subr.mxu0 0.0
    %292 = vmatpush1.msra.mxu0 %v273
    %293 = vmatprep.subr.mxu0 0.0
    %294 = vmatpush1.msra.mxu0 0.0
    %295 = vmatprep.subr.mxu0 0.0
    %296 = vmatpush1.msra.mxu0 0.0
    %297 = vmatprep.subr.mxu0 0.0
    %298 = vmatpush1.msra.mxu0 0.0
    %299 = vmatprep.subr.mxu0 0.0
    %300 = vmatpush1.msra.mxu0 0.0
    %301 = vmatprep.subr.mxu0 0.0
    %302 = vmatpush1.msra.mxu0 0.0
    %303 = vmatprep.subr.mxu0 0.0
    %304 = vmatpush1.msra.mxu0 0.0
    %305 = vmatprep.subr.mxu0 0.0
    %306 = vmatpush1.msra.mxu0 0.0
    %307 = vmatprep.subr.mxu0 0.0
    %308 = vmatpush1.msra.mxu0 0.0
    %309 = vmatprep.subr.mxu0 0.0
    %310 = vmatpush1.msra.mxu0 0.0
    %311 = vmatprep.subr.mxu0 0.0
    %312 = vmatpush1.msra.mxu0 0.0
    %313 = vmatprep.subr.mxu0 0.0
    %314 = vmatpush1.msra.mxu0 0.0
    %315 = vmatprep.subr.mxu0 0.0
    %316 = vmatpush1.msra.mxu0 0.0
    %317 = vmatprep.subr.mxu0 0.0
    %318 = vmatpush1.msra.mxu0 0.0
    %319 = vmatprep.subr.mxu0 0.0
    %320 = vmatpush1.msra.mxu0 0.0
    %321 = vmatprep.subr.mxu0 0.0
    %322 = vmatpush1.msra.mxu0 0.0
    %323 = vmatprep.subr.mxu0 0.0
    %324 = vmatpush1.msra.mxu0 0.0
    %325 = vmatprep.subr.mxu0 0.0
    %326 = vmatpush1.msra.mxu0 0.0
    %327 = vmatprep.subr.mxu0 0.0
    %328 = vmatpush1.msra.mxu0 0.0
    %329 = vmatprep.subr.mxu0 0.0
    %330 = vmatpush1.msra.mxu0 0.0
    %331 = vmatprep.subr.mxu0 0.0
    %332 = vmatpush1.msra.mxu0 0.0
    %333 = vmatprep.subr.mxu0 0.0
    %334 = vmatpush1.msra.mxu0 0.0
    %335 = vmatprep.subr.mxu0 0.0
    %336 = vmatpush1.msra.mxu0 0.0
    %337 = vmatprep.subr.mxu0 0.0
    %338 = vmatpush1.msra.mxu0 0.0
    %339 = vmatprep.subr.mxu0 0.0
    %340 = vmatpush1.msra.mxu0 0.0
    %341 = vmatprep.subr.mxu0 0.0
    %342 = vmatpush1.msra.mxu0 0.0
    %343 = vmatprep.subr.mxu0 0.0
    %344 = vmatpush1.msra.mxu0 0.0
    %345 = vmatprep.subr.mxu0 0.0
    %346 = vmatpush1.msra.mxu0 0.0
    %347 = vmatprep.subr.mxu0 0.0
    %348 = vmatpush1.msra.mxu0 0.0
    %349 = vmatprep.mubr.f32.mxu0 0.0
    %350 = vmatmul.mubr.f32.gmra.mrb[0].mxu0 %v283
    %v351 = vpop.f32.mrb[0].mxu0
    %v352 = vadd.f32 %v280, %v351
    %v353 = vpop.f32.mrb[0].mxu0
    %354 = vdwg.mxu0
    %v355 = vmax.f32 %v352, 0.0
    %v356 = vld [vmem:[#allocation8] sm:$0xff]
    %v357 = vld [vmem:[#allocation8 + $0x8] sm:$0xff]
    %v358 = vld [vmem:[#allocation8 + $0x10] sm:$0xff]
    %v359 = vld [vmem:[#allocation8 + $0x18] sm:$0xff]
    %v360 = vld [vmem:[%s7] sm:$0x1]
    %v362 = vlaneseq
    %v363 = vshrl.u32 %v362, 7
    %v364 = vsub.s32 0, %v363
    %v365 = vrot.slane %v360, %v364
    %v368 = vsel %vm194, %v355, 0
    %370 = vmatprep.subr.mxu0 0.0
    %371 = vmatpush1.msra.mxu0 %v356
    %372 = vmatprep.subr.mxu0 0.0
    %373 = vmatpush1.msra.mxu0 %v357
    %374 = vmatprep.subr.mxu0 0.0
    %375 = vmatpush1.msra.mxu0 %v358
    %376 = vmatprep.subr.mxu0 0.0
    %377 = vmatpush1.msra.mxu0 %v359
    %378 = vmatprep.subr.mxu0 0.0
    %379 = vmatpush1.msra.mxu0 0.0
    %380 = vmatprep.subr.mxu0 0.0
    %381 = vmatpush1.msra.mxu0 0.0
    %382 = vmatprep.subr.mxu0 0.0
    %383 = vmatpush1.msra.mxu0 0.0
    %384 = vmatprep.subr.mxu0 0.0
    %385 = vmatpush1.msra.mxu0 0.0
    %386 = vmatprep.subr.mxu0 0.0
    %387 = vmatpush1.msra.mxu0 0.0
    %388 = vmatprep.subr.mxu0 0.0
    %389 = vmatpush1.msra.mxu0 0.0
    %390 = vmatprep.subr.mxu0 0.0
    %391 = vmatpush1.msra.mxu0 0.0
    %392 = vmatprep.subr.mxu0 0.0
    %393 = vmatpush1.msra.mxu0 0.0
    %394 = vmatprep.subr.mxu0 0.0
    %395 = vmatpush1.msra.mxu0 0.0
    %396 = vmatprep.subr.mxu0 0.0
    %397 = vmatpush1.msra.mxu0 0.0
    %398 = vmatprep.subr.mxu0 0.0
    %399 = vmatpush1.msra.mxu0 0.0
    %400 = vmatprep.subr.mxu0 0.0
    %401 = vmatpush1.msra.mxu0 0.0
    %402 = vmatprep.subr.mxu0 0.0
    %403 = vmatpush1.msra.mxu0 0.0
    %404 = vmatprep.subr.mxu0 0.0
    %405 = vmatpush1.msra.mxu0 0.0
    %406 = vmatprep.subr.mxu0 0.0
    %407 = vmatpush1.msra.mxu0 0.0
    %408 = vmatprep.subr.mxu0 0.0
    %409 = vmatpush1.msra.mxu0 0.0
    %410 = vmatprep.subr.mxu0 0.0
    %411 = vmatpush1.msra.mxu0 0.0
    %412 = vmatprep.subr.mxu0 0.0
    %413 = vmatpush1.msra.mxu0 0.0
    %414 = vmatprep.subr.mxu0 0.0
    %415 = vmatpush1.msra.mxu0 0.0
    %416 = vmatprep.subr.mxu0 0.0
    %417 = vmatpush1.msra.mxu0 0.0
    %418 = vmatprep.subr.mxu0 0.0
    %419 = vmatpush1.msra.mxu0 0.0
    %420 = vmatprep.subr.mxu0 0.0
    %421 = vmatpush1.msra.mxu0 0.0
    %422 = vmatprep.subr.mxu0 0.0
    %423 = vmatpush1.msra.mxu0 0.0
    %424 = vmatprep.subr.mxu0 0.0
    %425 = vmatpush1.msra.mxu0 0.0
    %426 = vmatprep.subr.mxu0 0.0
    %427 = vmatpush1.msra.mxu0 0.0
    %428 = vmatprep.subr.mxu0 0.0
    %429 = vmatpush1.msra.mxu0 0.0
    %430 = vmatprep.subr.mxu0 0.0
    %431 = vmatpush1.msra.mxu0 0.0
    %432 = vmatprep.subr.mxu0 0.0
    %433 = vmatpush1.msra.mxu0 0.0
    %434 = vmatprep.mubr.f32.mxu0 0.0
    %435 = vmatmul.mubr.f32.gmra.mrb[0].mxu0 %v368
    %v436 = vpop.f32.mrb[0].mxu0
    %v437 = vadd.f32 %v365, %v436
    %v438 = vpop.f32.mrb[0].mxu0
    %439 = vdwg.mxu0
    %v440 = vld [vmem:[%s8] sm:$0x1]
    %v441 = vtanh.pop %v437
    %v443 = vlaneseq
    %v444 = vshrl.u32 %v443, 7
    %v445 = vsub.s32 0, %v444
    %v446 = vrot.slane %v440, %v445
    %v448 = vmul.f32 %v446, %v441
    %v449 = vmul.f32 %v448, 1.442695
    %v450 = vpow.pop %v449
    %v451 = vmul.f32 %v98, %v450
    %453 = vrot.lane.b32.xlu0 %v437, 112
    %v454 = vpop.permute.xlu0 %453
    %v456 = vadd.f32 %v451, %v454
    %v457 = vsel %vm108, %v448, 0.0
    %458 = vadd.xlane.f32.xlu0 %v457
    %v459 = vpop.xlane.xlu0 %458
    %v460 = vadd.f32 %v459, 0.0
    %s461 = scalar_lea.vmem [#allocation5], 16
    %v462 = vld [vmem:[%s461] sm:$0xff]
    %v463 = vld [vmem:[%s461 + $0x8] sm:$0xff]
    %s464 = scalar_lea.vmem %s3, 1
    %v465 = vld [vmem:[%s464] sm:$0x1]
    %v467 = vlaneseq
    %v468 = vshrl.u32 %v467, 7
    %v469 = vsub.s32 0, %v468
    %v470 = vrot.slane %v465, %v469
    %v473 = vsel %vm108, %v456, 0
    %475 = vmatprep.subr.mxu0 0.0
    %476 = vmatpush1.msra.mxu0 %v462
    %477 = vmatprep.subr.mxu0 0.0
    %478 = vmatpush1.msra.mxu0 %v463
    %479 = vmatprep.subr.mxu0 0.0
    %480 = vmatpush1.msra.mxu0 0.0
    %481 = vmatprep.subr.mxu0 0.0
    %482 = vmatpush1.msra.mxu0 0.0
    %483 = vmatprep.subr.mxu0 0.0
    %484 = vmatpush1.msra.mxu0 0.0
    %485 = vmatprep.subr.mxu0 0.0
    %486 = vmatpush1.msra.mxu0 0.0
    %487 = vmatprep.subr.mxu0 0.0
    %488 = vmatpush1.msra.mxu0 0.0
    %489 = vmatprep.subr.mxu0 0.0
    %490 = vmatpush1.msra.mxu0 0.0
    %491 = vmatprep.subr.mxu0 0.0
    %492 = vmatpush1.msra.mxu0 0.0
    %493 = vmatprep.subr.mxu0 0.0
    %494 = vmatpush1.msra.mxu0 0.0
    %495 = vmatprep.subr.mxu0 0.0
    %496 = vmatpush1.msra.mxu0 0.0
    %497 = vmatprep.subr.mxu0 0.0
    %498 = vmatpush1.msra.mxu0 0.0
    %499 = vmatprep.subr.mxu0 0.0
    %500 = vmatpush1.msra.mxu0 0.0
    %501 = vmatprep.subr.mxu0 0.0
    %502 = vmatpush1.msra.mxu0 0.0
    %503 = vmatprep.subr.mxu0 0.0
    %504 = vmatpush1.msra.mxu0 0.0
    %505 = vmatprep.subr.mxu0 0.0
    %506 = vmatpush1.msra.mxu0 0.0
    %507 = vmatprep.subr.mxu0 0.0
    %508 = vmatpush1.msra.mxu0 0.0
    %509 = vmatprep.subr.mxu0 0.0
    %510 = vmatpush1.msra.mxu0 0.0
    %511 = vmatprep.subr.mxu0 0.0
    %512 = vmatpush1.msra.mxu0 0.0
    %513 = vmatprep.subr.mxu0 0.0
    %514 = vmatpush1.msra.mxu0 0.0
    %515 = vmatprep.subr.mxu0 0.0
    %516 = vmatpush1.msra.mxu0 0.0
    %517 = vmatprep.subr.mxu0 0.0
    %518 = vmatpush1.msra.mxu0 0.0
    %519 = vmatprep.subr.mxu0 0.0
    %520 = vmatpush1.msra.mxu0 0.0
    %521 = vmatprep.subr.mxu0 0.0
    %522 = vmatpush1.msra.mxu0 0.0
    %523 = vmatprep.subr.mxu0 0.0
    %524 = vmatpush1.msra.mxu0 0.0
    %525 = vmatprep.subr.mxu0 0.0
    %526 = vmatpush1.msra.mxu0 0.0
    %527 = vmatprep.subr.mxu0 0.0
    %528 = vmatpush1.msra.mxu0 0.0
    %529 = vmatprep.subr.mxu0 0.0
    %530 = vmatpush1.msra.mxu0 0.0
    %531 = vmatprep.subr.mxu0 0.0
    %532 = vmatpush1.msra.mxu0 0.0
    %533 = vmatprep.subr.mxu0 0.0
    %534 = vmatpush1.msra.mxu0 0.0
    %535 = vmatprep.subr.mxu0 0.0
    %536 = vmatpush1.msra.mxu0 0.0
    %537 = vmatprep.subr.mxu0 0.0
    %538 = vmatpush1.msra.mxu0 0.0
    %539 = vmatprep.mubr.f32.mxu0 0.0
    %540 = vmatmul.mubr.f32.gmra.mrb[0].mxu0 %v473
    %v541 = vpop.f32.mrb[0].mxu0
    %v542 = vadd.f32 %v470, %v541
    %v543 = vpop.f32.mrb[0].mxu0
    %544 = vdwg.mxu0
    %v545 = vmax.f32 %v542, 0.0
    %s546 = scalar_lea.vmem [#allocation7], 64
    %v547 = vld [vmem:[%s546] sm:$0xff]
    %v548 = vld [vmem:[%s546 + $0x8] sm:$0xff]
    %v549 = vld [vmem:[%s546 + $0x10] sm:$0xff]
    %v550 = vld [vmem:[%s546 + $0x18] sm:$0xff]
    %s551 = scalar_lea.vmem %s5, 2
    %v552 = vld [vmem:[%s551] sm:$0x1]
    %v554 = vlaneseq
    %v555 = vshrl.u32 %v554, 7
    %v556 = vsub.s32 0, %v555
    %v557 = vrot.slane %v552, %v556
    %v560 = vsel %vm194, %v545, 0
    %562 = vmatprep.subr.mxu0 0.0
    %563 = vmatpush1.msra.mxu0 %v547
    %564 = vmatprep.subr.mxu0 0.0
    %565 = vmatpush1.msra.mxu0 %v548
    %566 = vmatprep.subr.mxu0 0.0
    %567 = vmatpush1.msra.mxu0 %v549
    %568 = vmatprep.subr.mxu0 0.0
    %569 = vmatpush1.msra.mxu0 %v550
    %570 = vmatprep.subr.mxu0 0.0
    %571 = vmatpush1.msra.mxu0 0.0
    %572 = vmatprep.subr.mxu0 0.0
    %573 = vmatpush1.msra.mxu0 0.0
    %574 = vmatprep.subr.mxu0 0.0
    %575 = vmatpush1.msra.mxu0 0.0
    %576 = vmatprep.subr.mxu0 0.0
    %577 = vmatpush1.msra.mxu0 0.0
    %578 = vmatprep.subr.mxu0 0.0
    %579 = vmatpush1.msra.mxu0 0.0
    %580 = vmatprep.subr.mxu0 0.0
    %581 = vmatpush1.msra.mxu0 0.0
    %582 = vmatprep.subr.mxu0 0.0
    %583 = vmatpush1.msra.mxu0 0.0
    %584 = vmatprep.subr.mxu0 0.0
    %585 = vmatpush1.msra.mxu0 0.0
    %586 = vmatprep.subr.mxu0 0.0
    %587 = vmatpush1.msra.mxu0 0.0
    %588 = vmatprep.subr.mxu0 0.0
    %589 = vmatpush1.msra.mxu0 0.0
    %590 = vmatprep.subr.mxu0 0.0
    %591 = vmatpush1.msra.mxu0 0.0
    %592 = vmatprep.subr.mxu0 0.0
    %593 = vmatpush1.msra.mxu0 0.0
    %594 = vmatprep.subr.mxu0 0.0
    %595 = vmatpush1.msra.mxu0 0.0
    %596 = vmatprep.subr.mxu0 0.0
    %597 = vmatpush1.msra.mxu0 0.0
    %598 = vmatprep.subr.mxu0 0.0
    %599 = vmatpush1.msra.mxu0 0.0
    %600 = vmatprep.subr.mxu0 0.0
    %601 = vmatpush1.msra.mxu0 0.0
    %602 = vmatprep.subr.mxu0 0.0
    %603 = vmatpush1.msra.mxu0 0.0
    %604 = vmatprep.subr.mxu0 0.0
    %605 = vmatpush1.msra.mxu0 0.0
    %606 = vmatprep.subr.mxu0 0.0
    %607 = vmatpush1.msra.mxu0 0.0
    %608 = vmatprep.subr.mxu0 0.0
    %609 = vmatpush1.msra.mxu0 0.0
    %610 = vmatprep.subr.mxu0 0.0
    %611 = vmatpush1.msra.mxu0 0.0
    %612 = vmatprep.subr.mxu0 0.0
    %613 = vmatpush1.msra.mxu0 0.0
    %614 = vmatprep.subr.mxu0 0.0
    %615 = vmatpush1.msra.mxu0 0.0
    %616 = vmatprep.subr.mxu0 0.0
    %617 = vmatpush1.msra.mxu0 0.0
    %618 = vmatprep.subr.mxu0 0.0
    %619 = vmatpush1.msra.mxu0 0.0
    %620 = vmatprep.subr.mxu0 0.0
    %621 = vmatpush1.msra.mxu0 0.0
    %622 = vmatprep.subr.mxu0 0.0
    %623 = vmatpush1.msra.mxu0 0.0
    %624 = vmatprep.subr.mxu0 0.0
    %625 = vmatpush1.msra.mxu0 0.0
    %626 = vmatprep.mubr.f32.mxu0 0.0
    %627 = vmatmul.mubr.f32.gmra.mrb[0].mxu0 %v560
    %v628 = vpop.f32.mrb[0].mxu0
    %v629 = vadd.f32 %v557, %v628
    %v630 = vpop.f32.mrb[0].mxu0
    %631 = vdwg.mxu0
    %v632 = vmax.f32 %v629, 0.0
    %s633 = scalar_lea.vmem [#allocation7], 96
    %v634 = vld [vmem:[%s633] sm:$0xff]
    %v635 = vld [vmem:[%s633 + $0x8] sm:$0xff]
    %v636 = vld [vmem:[%s633 + $0x10] sm:$0xff]
    %v637 = vld [vmem:[%s633 + $0x18] sm:$0xff]
    %s638 = scalar_lea.vmem %s5, 3
    %v639 = vld [vmem:[%s638] sm:$0x1]
    %v641 = vlaneseq
    %v642 = vshrl.u32 %v641, 7
    %v643 = vsub.s32 0, %v642
    %v644 = vrot.slane %v639, %v643
    %v647 = vsel %vm194, %v632, 0
    %649 = vmatprep.subr.mxu0 0.0
    %650 = vmatpush1.msra.mxu0 %v634
    %651 = vmatprep.subr.mxu0 0.0
    %652 = vmatpush1.msra.mxu0 %v635
    %653 = vmatprep.subr.mxu0 0.0
    %654 = vmatpush1.msra.mxu0 %v636
    %655 = vmatprep.subr.mxu0 0.0
    %656 = vmatpush1.msra.mxu0 %v637
    %657 = vmatprep.subr.mxu0 0.0
    %658 = vmatpush1.msra.mxu0 0.0
    %659 = vmatprep.subr.mxu0 0.0
    %660 = vmatpush1.msra.mxu0 0.0
    %661 = vmatprep.subr.mxu0 0.0
    %662 = vmatpush1.msra.mxu0 0.0
    %663 = vmatprep.subr.mxu0 0.0
    %664 = vmatpush1.msra.mxu0 0.0
    %665 = vmatprep.subr.mxu0 0.0
    %666 = vmatpush1.msra.mxu0 0.0
    %667 = vmatprep.subr.mxu0 0.0
    %668 = vmatpush1.msra.mxu0 0.0
    %669 = vmatprep.subr.mxu0 0.0
    %670 = vmatpush1.msra.mxu0 0.0
    %671 = vmatprep.subr.mxu0 0.0
    %672 = vmatpush1.msra.mxu0 0.0
    %673 = vmatprep.subr.mxu0 0.0
    %674 = vmatpush1.msra.mxu0 0.0
    %675 = vmatprep.subr.mxu0 0.0
    %676 = vmatpush1.msra.mxu0 0.0
    %677 = vmatprep.subr.mxu0 0.0
    %678 = vmatpush1.msra.mxu0 0.0
    %679 = vmatprep.subr.mxu0 0.0
    %680 = vmatpush1.msra.mxu0 0.0
    %681 = vmatprep.subr.mxu0 0.0
    %682 = vmatpush1.msra.mxu0 0.0
    %683 = vmatprep.subr.mxu0 0.0
    %684 = vmatpush1.msra.mxu0 0.0
    %685 = vmatprep.subr.mxu0 0.0
    %686 = vmatpush1.msra.mxu0 0.0
    %687 = vmatprep.subr.mxu0 0.0
    %688 = vmatpush1.msra.mxu0 0.0
    %689 = vmatprep.subr.mxu0 0.0
    %690 = vmatpush1.msra.mxu0 0.0
    %691 = vmatprep.subr.mxu0 0.0
    %692 = vmatpush1.msra.mxu0 0.0
    %693 = vmatprep.subr.mxu0 0.0
    %694 = vmatpush1.msra.mxu0 0.0
    %695 = vmatprep.subr.mxu0 0.0
    %696 = vmatpush1.msra.mxu0 0.0
    %697 = vmatprep.subr.mxu0 0.0
    %698 = vmatpush1.msra.mxu0 0.0
    %699 = vmatprep.subr.mxu0 0.0
    %700 = vmatpush1.msra.mxu0 0.0
    %701 = vmatprep.subr.mxu0 0.0
    %702 = vmatpush1.msra.mxu0 0.0
    %703 = vmatprep.subr.mxu0 0.0
    %704 = vmatpush1.msra.mxu0 0.0
    %705 = vmatprep.subr.mxu0 0.0
    %706 = vmatpush1.msra.mxu0 0.0
    %707 = vmatprep.subr.mxu0 0.0
    %708 = vmatpush1.msra.mxu0 0.0
    %709 = vmatprep.subr.mxu0 0.0
    %710 = vmatpush1.msra.mxu0 0.0
    %711 = vmatprep.subr.mxu0 0.0
    %712 = vmatpush1.msra.mxu0 0.0
    %713 = vmatprep.mubr.f32.mxu0 0.0
    %714 = vmatmul.mubr.f32.gmra.mrb[0].mxu0 %v647
    %v715 = vpop.f32.mrb[0].mxu0
    %v716 = vadd.f32 %v644, %v715
    %v717 = vpop.f32.mrb[0].mxu0
    %718 = vdwg.mxu0
    %v719 = vmax.f32 %v716, 0.0
    %s720 = scalar_lea.vmem [#allocation8], 32
    %v721 = vld [vmem:[%s720] sm:$0xff]
    %v722 = vld [vmem:[%s720 + $0x8] sm:$0xff]
    %v723 = vld [vmem:[%s720 + $0x10] sm:$0xff]
    %v724 = vld [vmem:[%s720 + $0x18] sm:$0xff]
    %s725 = scalar_lea.vmem %s7, 1
    %v726 = vld [vmem:[%s725] sm:$0x1]
    %v728 = vlaneseq
    %v729 = vshrl.u32 %v728, 7
    %v730 = vsub.s32 0, %v729
    %v731 = vrot.slane %v726, %v730
    %v734 = vsel %vm194, %v719, 0
    %736 = vmatprep.subr.mxu0 0.0
    %737 = vmatpush1.msra.mxu0 %v721
    %738 = vmatprep.subr.mxu0 0.0
    %739 = vmatpush1.msra.mxu0 %v722
    %740 = vmatprep.subr.mxu0 0.0
    %741 = vmatpush1.msra.mxu0 %v723
    %742 = vmatprep.subr.mxu0 0.0
    %743 = vmatpush1.msra.mxu0 %v724
    %744 = vmatprep.subr.mxu0 0.0
    %745 = vmatpush1.msra.mxu0 0.0
    %746 = vmatprep.subr.mxu0 0.0
    %747 = vmatpush1.msra.mxu0 0.0
    %748 = vmatprep.subr.mxu0 0.0
    %749 = vmatpush1.msra.mxu0 0.0
    %750 = vmatprep.subr.mxu0 0.0
    %751 = vmatpush1.msra.mxu0 0.0
    %752 = vmatprep.subr.mxu0 0.0
    %753 = vmatpush1.msra.mxu0 0.0
    %754 = vmatprep.subr.mxu0 0.0
    %755 = vmatpush1.msra.mxu0 0.0
    %756 = vmatprep.subr.mxu0 0.0
    %757 = vmatpush1.msra.mxu0 0.0
    %758 = vmatprep.subr.mxu0 0.0
    %759 = vmatpush1.msra.mxu0 0.0
    %760 = vmatprep.subr.mxu0 0.0
    %761 = vmatpush1.msra.mxu0 0.0
    %762 = vmatprep.subr.mxu0 0.0
    %763 = vmatpush1.msra.mxu0 0.0
    %764 = vmatprep.subr.mxu0 0.0
    %765 = vmatpush1.msra.mxu0 0.0
    %766 = vmatprep.subr.mxu0 0.0
    %767 = vmatpush1.msra.mxu0 0.0
    %768 = vmatprep.subr.mxu0 0.0
    %769 = vmatpush1.msra.mxu0 0.0
    %770 = vmatprep.subr.mxu0 0.0
    %771 = vmatpush1.msra.mxu0 0.0
    %772 = vmatprep.subr.mxu0 0.0
    %773 = vmatpush1.msra.mxu0 0.0
    %774 = vmatprep.subr.mxu0 0.0
    %775 = vmatpush1.msra.mxu0 0.0
    %776 = vmatprep.subr.mxu0 0.0
    %777 = vmatpush1.msra.mxu0 0.0
    %778 = vmatprep.subr.mxu0 0.0
    %779 = vmatpush1.msra.mxu0 0.0
    %780 = vmatprep.subr.mxu0 0.0
    %781 = vmatpush1.msra.mxu0 0.0
    %782 = vmatprep.subr.mxu0 0.0
    %783 = vmatpush1.msra.mxu0 0.0
    %784 = vmatprep.subr.mxu0 0.0
    %785 = vmatpush1.msra.mxu0 0.0
    %786 = vmatprep.subr.mxu0 0.0
    %787 = vmatpush1.msra.mxu0 0.0
    %788 = vmatprep.subr.mxu0 0.0
    %789 = vmatpush1.msra.mxu0 0.0
    %790 = vmatprep.subr.mxu0 0.0
    %791 = vmatpush1.msra.mxu0 0.0
    %792 = vmatprep.subr.mxu0 0.0
    %793 = vmatpush1.msra.mxu0 0.0
    %794 = vmatprep.subr.mxu0 0.0
    %795 = vmatpush1.msra.mxu0 0.0
    %796 = vmatprep.subr.mxu0 0.0
    %797 = vmatpush1.msra.mxu0 0.0
    %798 = vmatprep.subr.mxu0 0.0
    %799 = vmatpush1.msra.mxu0 0.0
    %800 = vmatprep.mubr.f32.mxu0 0.0
    %801 = vmatmul.mubr.f32.gmra.mrb[0].mxu0 %v734
    %v802 = vpop.f32.mrb[0].mxu0
    %v803 = vadd.f32 %v731, %v802
    %v804 = vpop.f32.mrb[0].mxu0
    %805 = vdwg.mxu0
    %s806 = scalar_lea.vmem %s8, 1
    %v807 = vld [vmem:[%s806] sm:$0x1]
    %v808 = vtanh.pop %v803
    %v810 = vlaneseq
    %v811 = vshrl.u32 %v810, 7
    %v812 = vsub.s32 0, %v811
    %v813 = vrot.slane %v807, %v812
    %v815 = vmul.f32 %v813, %v808
    %v816 = vmul.f32 %v815, 1.442695
    %v817 = vpow.pop %v816
    %v818 = vmul.f32 %v456, %v817
    %820 = vrot.lane.b32.xlu0 %v803, 112
    %v821 = vpop.permute.xlu0 %820
    %v823 = vadd.f32 %v818, %v821
    %v824 = vsel %vm108, %v815, 0.0
    %825 = vadd.xlane.f32.xlu0 %v824
    %v826 = vpop.xlane.xlu0 %825
    %v827 = vadd.f32 %v460, %v826
    %v828 = vld [vmem:[%s9] sm:$0xff]
    %v829 = vld [vmem:[%s9 + $0x8] sm:$0xff]
    %v830 = vld [vmem:[%s10] sm:$0x1]
    %v832 = vlaneseq
    %v833 = vshrl.u32 %v832, 7
    %v834 = vsub.s32 0, %v833
    %v835 = vrot.slane %v830, %v834
    %v838 = vsel %vm108, %v823, 0
    %840 = vmatprep.subr.mxu0 0.0
    %841 = vmatpush1.msra.mxu0 %v828
    %842 = vmatprep.subr.mxu0 0.0
    %843 = vmatpush1.msra.mxu0 %v829
    %844 = vmatprep.subr.mxu0 0.0
    %845 = vmatpush1.msra.mxu0 0.0
    %846 = vmatprep.subr.mxu0 0.0
    %847 = vmatpush1.msra.mxu0 0.0
    %848 = vmatprep.subr.mxu0 0.0
    %849 = vmatpush1.msra.mxu0 0.0
    %850 = vmatprep.subr.mxu0 0.0
    %851 = vmatpush1.msra.mxu0 0.0
    %852 = vmatprep.subr.mxu0 0.0
    %853 = vmatpush1.msra.mxu0 0.0
    %854 = vmatprep.subr.mxu0 0.0
    %855 = vmatpush1.msra.mxu0 0.0
    %856 = vmatprep.subr.mxu0 0.0
    %857 = vmatpush1.msra.mxu0 0.0
    %858 = vmatprep.subr.mxu0 0.0
    %859 = vmatpush1.msra.mxu0 0.0
    %860 = vmatprep.subr.mxu0 0.0
    %861 = vmatpush1.msra.mxu0 0.0
    %862 = vmatprep.subr.mxu0 0.0
    %863 = vmatpush1.msra.mxu0 0.0
    %864 = vmatprep.subr.mxu0 0.0
    %865 = vmatpush1.msra.mxu0 0.0
    %866 = vmatprep.subr.mxu0 0.0
    %867 = vmatpush1.msra.mxu0 0.0
    %868 = vmatprep.subr.mxu0 0.0
    %869 = vmatpush1.msra.mxu0 0.0
    %870 = vmatprep.subr.mxu0 0.0
    %871 = vmatpush1.msra.mxu0 0.0
    %872 = vmatprep.subr.mxu0 0.0
    %873 = vmatpush1.msra.mxu0 0.0
    %874 = vmatprep.subr.mxu0 0.0
    %875 = vmatpush1.msra.mxu0 0.0
    %876 = vmatprep.subr.mxu0 0.0
    %877 = vmatpush1.msra.mxu0 0.0
    %878 = vmatprep.subr.mxu0 0.0
    %879 = vmatpush1.msra.mxu0 0.0
    %880 = vmatprep.subr.mxu0 0.0
    %881 = vmatpush1.msra.mxu0 0.0
    %882 = vmatprep.subr.mxu0 0.0
    %883 = vmatpush1.msra.mxu0 0.0
    %884 = vmatprep.subr.mxu0 0.0
    %885 = vmatpush1.msra.mxu0 0.0
    %886 = vmatprep.subr.mxu0 0.0
    %887 = vmatpush1.msra.mxu0 0.0
    %888 = vmatprep.subr.mxu0 0.0
    %889 = vmatpush1.msra.mxu0 0.0
    %890 = vmatprep.subr.mxu0 0.0
    %891 = vmatpush1.msra.mxu0 0.0
    %892 = vmatprep.subr.mxu0 0.0
    %893 = vmatpush1.msra.mxu0 0.0
    %894 = vmatprep.subr.mxu0 0.0
    %895 = vmatpush1.msra.mxu0 0.0
    %896 = vmatprep.subr.mxu0 0.0
    %897 = vmatpush1.msra.mxu0 0.0
    %898 = vmatprep.subr.mxu0 0.0
    %899 = vmatpush1.msra.mxu0 0.0
    %900 = vmatprep.subr.mxu0 0.0
    %901 = vmatpush1.msra.mxu0 0.0
    %902 = vmatprep.subr.mxu0 0.0
    %903 = vmatpush1.msra.mxu0 0.0
    %904 = vmatprep.mubr.f32.mxu0 0.0
    %905 = vmatmul.mubr.f32.gmra.mrb[0].mxu0 %v838
    %v906 = vpop.f32.mrb[0].mxu0
    %v907 = vadd.f32 %v835, %v906
    %v908 = vpop.f32.mrb[0].mxu0
    %909 = vdwg.mxu0
    %v910 = vmul.f32 %v907, 0.5
    %v911 = vmul.f32 %v910, 1.442695
    %v912 = vpow.pop %v911
    %v913 = vld [vmem:[#allocation2] sm:$0xff]
    %915 = vrot.lane.b32.xlu0 %v912, 112
    %v916 = vpop.permute.xlu0 %915
    %v918 = vmul.f32 %v913, %v916
    %v919 = vadd.f32 %v918, %v907
    %v920 = vld [vmem:[%s11] sm:$0xff]
    %v921 = vld [vmem:[%s11 + $0x8] sm:$0xff]
    %v922 = vld [vmem:[%s12] sm:$0x1]
    %v924 = vlaneseq
    %v925 = vshrl.u32 %v924, 7
    %v926 = vsub.s32 0, %v925
    %v927 = vrot.slane %v922, %v926
    %v930 = vsel %vm108, %v919, 0
    %932 = vmatprep.subr.mxu0 0.0
    %933 = vmatpush1.msra.mxu0 %v920
    %934 = vmatprep.subr.mxu0 0.0
    %935 = vmatpush1.msra.mxu0 %v921
    %936 = vmatprep.subr.mxu0 0.0
    %937 = vmatpush1.msra.mxu0 0.0
    %938 = vmatprep.subr.mxu0 0.0
    %939 = vmatpush1.msra.mxu0 0.0
    %940 = vmatprep.subr.mxu0 0.0
    %941 = vmatpush1.msra.mxu0 0.0
    %942 = vmatprep.subr.mxu0 0.0
    %943 = vmatpush1.msra.mxu0 0.0
    %944 = vmatprep.subr.mxu0 0.0
    %945 = vmatpush1.msra.mxu0 0.0
    %946 = vmatprep.subr.mxu0 0.0
    %947 = vmatpush1.msra.mxu0 0.0
    %948 = vmatprep.subr.mxu0 0.0
    %949 = vmatpush1.msra.mxu0 0.0
    %950 = vmatprep.subr.mxu0 0.0
    %951 = vmatpush1.msra.mxu0 0.0
    %952 = vmatprep.subr.mxu0 0.0
    %953 = vmatpush1.msra.mxu0 0.0
    %954 = vmatprep.subr.mxu0 0.0
    %955 = vmatpush1.msra.mxu0 0.0
    %956 = vmatprep.subr.mxu0 0.0
    %957 = vmatpush1.msra.mxu0 0.0
    %958 = vmatprep.subr.mxu0 0.0
    %959 = vmatpush1.msra.mxu0 0.0
    %960 = vmatprep.subr.mxu0 0.0
    %961 = vmatpush1.msra.mxu0 0.0
    %962 = vmatprep.subr.mxu0 0.0
    %963 = vmatpush1.msra.mxu0 0.0
    %964 = vmatprep.subr.mxu0 0.0
    %965 = vmatpush1.msra.mxu0 0.0
    %966 = vmatprep.subr.mxu0 0.0
    %967 = vmatpush1.msra.mxu0 0.0
    %968 = vmatprep.subr.mxu0 0.0
    %969 = vmatpush1.msra.mxu0 0.0
    %970 = vmatprep.subr.mxu0 0.0
    %971 = vmatpush1.msra.mxu0 0.0
    %972 = vmatprep.subr.mxu0 0.0
    %973 = vmatpush1.msra.mxu0 0.0
    %974 = vmatprep.subr.mxu0 0.0
    %975 = vmatpush1.msra.mxu0 0.0
    %976 = vmatprep.subr.mxu0 0.0
    %977 = vmatpush1.msra.mxu0 0.0
    %978 = vmatprep.subr.mxu0 0.0
    %979 = vmatpush1.msra.mxu0 0.0
    %980 = vmatprep.subr.mxu0 0.0
    %981 = vmatpush1.msra.mxu0 0.0
    %982 = vmatprep.subr.mxu0 0.0
    %983 = vmatpush1.msra.mxu0 0.0
    %984 = vmatprep.subr.mxu0 0.0
    %985 = vmatpush1.msra.mxu0 0.0
    %986 = vmatprep.subr.mxu0 0.0
    %987 = vmatpush1.msra.mxu0 0.0
    %988 = vmatprep.subr.mxu0 0.0
    %989 = vmatpush1.msra.mxu0 0.0
    %990 = vmatprep.subr.mxu0 0.0
    %991 = vmatpush1.msra.mxu0 0.0
    %992 = vmatprep.subr.mxu0 0.0
    %993 = vmatpush1.msra.mxu0 0.0
    %994 = vmatprep.subr.mxu0 0.0
    %995 = vmatpush1.msra.mxu0 0.0
    %996 = vmatprep.mubr.f32.mxu0 0.0
    %997 = vmatmul.mubr.f32.gmra.mrb[0].mxu0 %v930
    %v998 = vpop.f32.mrb[0].mxu0
    %v999 = vadd.f32 %v927, %v998
    %v1000 = vpop.f32.mrb[0].mxu0
    %1001 = vdwg.mxu0
    %vm1002 = vcmask 31744
    %v1003 = vsel %vm1002, %v999, -inf
    %1004 = vmax.xlane.f32.xlu0 %v1003
    %v1005 = vpop.xlane.xlu0 %1004
    %v1006 = vsub.f32 %v999, %v1005
    %v1007 = vmul.f32 %v1006, 1.442695
    %v1008 = vpow.pop %v1007
    %v1009 = vsel %vm1002, %v1008, 0.0
    %1010 = vadd.xlane.f32.xlu0 %v1009
    %v1011 = vpop.xlane.xlu0 %1010
    %v1012 = vrcp.pop %v1011
    %v1013 = vmul.f32 %v1008, %v1012
    %1015 = vrot.lane.b32.xlu0 %v907, 16
    %v1016 = vpop.permute.xlu0 %1015
    %1019 = vrot.lane.b32.xlu0 %v1013, 49
    %v1020 = vpop.permute.xlu0 %1019
    %v1022 = vsel %vm108, %v823, %v1016
    %v1023 = vsel %vm194, %v1022, %v1016
    %vm1024 = vcmask 392192
    %v1025 = vsel %vm1024, %v1023, %v827
    %vm1026 = vcmask 400384
    %v1027 = vsel %vm1026, %v1025, %v1020
    %vm1028 = vcmask 433152
    %v1029 = vsel %vm1028, %v1027, 0.0
    %1030 = vst [vmem:[#allocation10] sm:$0xff] %v1029
    // Predicated region
    $region70: #{tpu_custom_call.1} parent=1 // pred_check
      _
    $region71: #{tpu_custom_call.1} parent=1 // pred_check_branch
      %1032 = sbr.rel (0) target = $region73
    $region72: #{tpu_custom_call.1} parent=1 // pred_region
      %s1034 = ssub.s32 128, 128
      %1035 = vsyncadd [#allocation4], %s1034
      %s1037 = sshll.u32 [#allocation10], 4
      %s1038 = int_to_ptr.vmem [resolvable:$true] %s1037
      %1040 = dma.vmem_to_hbm [thread:$0]  %s1038, 128, %s13, [#allocation4]
    $region73: #{tpu_custom_call.1} parent=1 // pred_fallthru
      _
    // Predicated region
    $region74: #{tpu_custom_call.1} parent=1 // pred_check
      _
    $region75: #{tpu_custom_call.1} parent=1 // pred_check_branch
      %1042 = sbr.rel (0) target = $region77
    $region76: #{tpu_custom_call.1} parent=1 // pred_region
      %1043 = dma.done [#allocation4], 128
    $region77: #{tpu_custom_call.1} parent=1 // pred_fallthru
      _
    %1044 = vsyncpa [#allocation3], 1
    %1045 = vsyncpa [#allocation6], 1
    %1046 = vsyncpa [#allocation9], 1
    %1047 = vsyncpa [#allocation4], 1

</llo_original>
